<compile_context>
chip_gen: v7x
topology: tpu7x:2x2x1
jax: 0.10.0
libtpu: 0.0.40
codegen_flags: <defaults>
</compile_context>

<pallas_src>
import functools
import math

import jax
import jax.numpy as jnp
from jax import lax
from jax.experimental import pallas as pl
from jax.experimental.pallas import tpu as pltpu


# ---------------------------------------------------------------------------
# Fused multi-head self-attention kernel (one image per grid step)
# ---------------------------------------------------------------------------
def _self_attention_kernel(x_ref, wq_ref, bq_ref, wk_ref, bk_ref,
                           wv_ref, bv_ref, wo_ref, bo_ref, o_ref,
                           *, num_heads, scale):
    x = x_ref[0]                                                   # (nq, d_model) f32

    # QKV projections: (nq, d_model) @ (d_model, d_model) on the MXU.
    q = jnp.dot(x, wq_ref[...], preferred_element_type=jnp.float32) + bq_ref[...]
    k = jnp.dot(x, wk_ref[...], preferred_element_type=jnp.float32) + bk_ref[...]
    v = jnp.dot(x, wv_ref[...], preferred_element_type=jnp.float32) + bv_ref[...]
    wo = wo_ref[...]                                               # (d_model, d_model)

    nq, d_model = x.shape
    dk = d_model // num_heads

    acc = jnp.zeros((nq, d_model), jnp.float32)
    # Static (unrolled) head loop: num_heads is small & compile-time constant.
    # Avoids any in-kernel reshape/transpose/concatenate of the head axis.
    for hh in range(num_heads):
        sl = slice(hh * dk, (hh + 1) * dk)
        qh = q[:, sl]                                              # (nq, dk)
        kh = k[:, sl]                                              # (nk, dk)
        vh = v[:, sl]                                              # (nk, dk)

        # q @ k^T without an explicit transpose (contract last dims) -> MXU.
        att = lax.dot_general(qh, kh, (((1,), (1,)), ((), ())),
                              preferred_element_type=jnp.float32) * scale   # (nq, nk)

        # Numerically-stable softmax along keys.
        att = att - jnp.max(att, axis=-1, keepdims=True)
        p = jnp.exp(att)
        denom = jnp.sum(p, axis=-1, keepdims=True)
        p = p * pl.reciprocal(denom, approx=True)                  # EUP, not VALU

        ctx = jnp.dot(p, vh, preferred_element_type=jnp.float32)   # (nq, dk)

        # Fused out-projection: accumulate this head's contribution directly,
        # so per-head contexts are never concatenated.
        acc = acc + jnp.dot(ctx, wo[sl, :], preferred_element_type=jnp.float32)

    o_ref[0] = (acc + bo_ref[...]).astype(o_ref.dtype)


# ---------------------------------------------------------------------------
# Wrapper
# ---------------------------------------------------------------------------
def self_attention_forward(x, params, num_heads):
    """Equivalent of SelfAttention.forward(x) (mask/weights None, eval dropout).

    x:      (b_s, nx, d_model) float32
    params: (wq, bq, wk, bk, wv, bv, wo, bo) with weights already in
            (in_features, out_features) layout and biases shaped (1, d_model).
    """
    b, nq, d_model = x.shape
    assert d_model % num_heads == 0
    dk = d_model // num_heads
    scale = 1.0 / math.sqrt(dk)
    wq, bq, wk, bk, wv, bv, wo, bo = params

    kernel = functools.partial(_self_attention_kernel,
                               num_heads=num_heads, scale=scale)

    w_spec = pl.BlockSpec((d_model, d_model), lambda i: (0, 0))
    b_spec = pl.BlockSpec((1, d_model), lambda i: (0, 0))

    return pl.pallas_call(
        kernel,
        out_shape=jax.ShapeDtypeStruct((b, nq, d_model), x.dtype),
        grid=(b,),
        in_specs=[pl.BlockSpec((1, nq, d_model), lambda i: (i, 0, 0)),
                  w_spec, b_spec,      # que_proj
                  w_spec, b_spec,      # key_proj
                  w_spec, b_spec,      # val_proj
                  w_spec, b_spec],     # out_proj
        out_specs=pl.BlockSpec((1, nq, d_model), lambda i: (i, 0, 0)),
        compiler_params=pltpu.CompilerParams(
            dimension_semantics=("parallel",)),   # shards images across TCs on v7x
    )(x, wq, bq, wk, bk, wv, bv, wo, bo)


# ---------------------------------------------------------------------------
# Pure-JAX reference (mirrors the PyTorch forward) for a correctness check
# ---------------------------------------------------------------------------
def _reference_forward(x, params, num_heads):
    wq, bq, wk, bk, wv, bv, wo, bo = params
    b, nq, d = x.shape
    dk = d // num_heads
    q = (x @ wq + bq).reshape(b, nq, num_heads, dk).transpose(0, 2, 1, 3)
    k = (x @ wk + bk).reshape(b, nq, num_heads, dk).transpose(0, 2, 3, 1)
    v = (x @ wv + bv).reshape(b, nq, num_heads, dk).transpose(0, 2, 1, 3)
    att = (q @ k) / math.sqrt(dk)
    att = jax.nn.softmax(att, axis=-1)
    out = (att @ v).transpose(0, 2, 1, 3).reshape(b, nq, d)
    return out @ wo + bo


if __name__ == "__main__":
    B, SEQ, D_MODEL, H = 2, 8, 32, 4   # (b_s, nx, d_model), h heads

    key = jax.random.PRNGKey(0)
    kx, kq, kk, kv, ko = jax.random.split(key, 5)

    x = jax.random.normal(kx, (B, SEQ, D_MODEL), jnp.float32)

    # Match init_weights(): Linear weight ~ N(0, 0.001), bias = 0.
    # PyTorch Linear computes x @ W^T; store W^T, i.e. (in, out) layout.
    def make_linear(k):
        w_pt = 0.001 * jax.random.normal(k, (D_MODEL, D_MODEL), jnp.float32)
        return w_pt.T, jnp.zeros((1, D_MODEL), jnp.float32)

    wq, bq = make_linear(kq)
    wk, bk = make_linear(kk)
    wv, bv = make_linear(kv)
    wo, bo = make_linear(ko)
    params = (wq, bq, wk, bk, wv, bv, wo, bo)

    out = jax.jit(functools.partial(self_attention_forward, num_heads=H))(x, params)
    jax.block_until_ready(out)

    ref = _reference_forward(x, params, H)
    assert out.shape == (B, SEQ, D_MODEL)
    assert bool(jnp.allclose(out, ref, rtol=1e-2, atol=1e-5)), "mismatch vs reference"

    print("KERNEL_OK")
</pallas_src>

<mosaic_0001>
module attributes {stable_mosaic.version = 11 : i64} {
  func.func @_self_attention_kernel(%arg0: i32, %arg1: memref<1x8x32xf32, #tpu.memory_space<vmem>>, %arg2: memref<32x32xf32, #tpu.memory_space<vmem>>, %arg3: memref<1x32xf32, #tpu.memory_space<vmem>>, %arg4: memref<32x32xf32, #tpu.memory_space<vmem>>, %arg5: memref<1x32xf32, #tpu.memory_space<vmem>>, %arg6: memref<32x32xf32, #tpu.memory_space<vmem>>, %arg7: memref<1x32xf32, #tpu.memory_space<vmem>>, %arg8: memref<32x32xf32, #tpu.memory_space<vmem>>, %arg9: memref<1x32xf32, #tpu.memory_space<vmem>>, %arg10: memref<1x8x32xf32, #tpu.memory_space<vmem>>) attributes {dimension_semantics = [#tpu.dimension_semantics<parallel>], iteration_bounds = array<i64: 2>, scalar_prefetch = 0 : i64, scratch_operands = 0 : i64, tpu.core_type = #tpu.core_type<tc>, window_params = [{transform_indices = @transform_0, window_bounds = array<i64: 1, 8, 32>}, {pipeline_mode = #tpu.pipeline_mode<synchronous>, transform_indices = @transform_1, window_bounds = array<i64: 32, 32>}, {pipeline_mode = #tpu.pipeline_mode<synchronous>, transform_indices = @transform_2, window_bounds = array<i64: 1, 32>}, {pipeline_mode = #tpu.pipeline_mode<synchronous>, transform_indices = @transform_3, window_bounds = array<i64: 32, 32>}, {pipeline_mode = #tpu.pipeline_mode<synchronous>, transform_indices = @transform_4, window_bounds = array<i64: 1, 32>}, {pipeline_mode = #tpu.pipeline_mode<synchronous>, transform_indices = @transform_5, window_bounds = array<i64: 32, 32>}, {pipeline_mode = #tpu.pipeline_mode<synchronous>, transform_indices = @transform_6, window_bounds = array<i64: 1, 32>}, {pipeline_mode = #tpu.pipeline_mode<synchronous>, transform_indices = @transform_7, window_bounds = array<i64: 32, 32>}, {pipeline_mode = #tpu.pipeline_mode<synchronous>, transform_indices = @transform_8, window_bounds = array<i64: 1, 32>}, {transform_indices = @transform_9, window_bounds = array<i64: 1, 8, 32>}]} {
    %c0 = arith.constant 0 : index
    %c0_0 = arith.constant 0 : index
    %c0_1 = arith.constant 0 : index
    %0 = vector.load %arg1[%c0, %c0_0, %c0_1] : memref<1x8x32xf32, #tpu.memory_space<vmem>>, vector<1x8x32xf32>
    %1 = vector.shape_cast %0 : vector<1x8x32xf32> to vector<8x32xf32>
    %c0_2 = arith.constant 0 : index
    %c0_3 = arith.constant 0 : index
    %2 = vector.load %arg2[%c0_2, %c0_3] : memref<32x32xf32, #tpu.memory_space<vmem>>, vector<32x32xf32>
    %cst = arith.constant dense<0.000000e+00> : vector<8x32xf32>
    %3 = tpu.matmul %1, %2, %cst {dimension_numbers = #tpu.dot_dimension_numbers<[1], [0], [0], [1], [0, 0, 1, 1], [], []>} : vector<8x32xf32>, vector<32x32xf32>, vector<8x32xf32> -> vector<8x32xf32>
    %c0_4 = arith.constant 0 : index
    %c0_5 = arith.constant 0 : index
    %4 = vector.load %arg3[%c0_4, %c0_5] : memref<1x32xf32, #tpu.memory_space<vmem>>, vector<1x32xf32>
    %5 = vector.broadcast %4 : vector<1x32xf32> to vector<8x32xf32>
    %6 = arith.addf %3, %5 : vector<8x32xf32>
    %c0_6 = arith.constant 0 : index
    %c0_7 = arith.constant 0 : index
    %7 = vector.load %arg4[%c0_6, %c0_7] : memref<32x32xf32, #tpu.memory_space<vmem>>, vector<32x32xf32>
    %cst_8 = arith.constant dense<0.000000e+00> : vector<8x32xf32>
    %8 = tpu.matmul %1, %7, %cst_8 {dimension_numbers = #tpu.dot_dimension_numbers<[1], [0], [0], [1], [0, 0, 1, 1], [], []>} : vector<8x32xf32>, vector<32x32xf32>, vector<8x32xf32> -> vector<8x32xf32>
    %c0_9 = arith.constant 0 : index
    %c0_10 = arith.constant 0 : index
    %9 = vector.load %arg5[%c0_9, %c0_10] : memref<1x32xf32, #tpu.memory_space<vmem>>, vector<1x32xf32>
    %10 = vector.broadcast %9 : vector<1x32xf32> to vector<8x32xf32>
    %11 = arith.addf %8, %10 : vector<8x32xf32>
    %c0_11 = arith.constant 0 : index
    %c0_12 = arith.constant 0 : index
    %12 = vector.load %arg6[%c0_11, %c0_12] : memref<32x32xf32, #tpu.memory_space<vmem>>, vector<32x32xf32>
    %cst_13 = arith.constant dense<0.000000e+00> : vector<8x32xf32>
    %13 = tpu.matmul %1, %12, %cst_13 {dimension_numbers = #tpu.dot_dimension_numbers<[1], [0], [0], [1], [0, 0, 1, 1], [], []>} : vector<8x32xf32>, vector<32x32xf32>, vector<8x32xf32> -> vector<8x32xf32>
    %c0_14 = arith.constant 0 : index
    %c0_15 = arith.constant 0 : index
    %14 = vector.load %arg7[%c0_14, %c0_15] : memref<1x32xf32, #tpu.memory_space<vmem>>, vector<1x32xf32>
    %15 = vector.broadcast %14 : vector<1x32xf32> to vector<8x32xf32>
    %16 = arith.addf %13, %15 : vector<8x32xf32>
    %c0_16 = arith.constant 0 : index
    %c0_17 = arith.constant 0 : index
    %17 = vector.load %arg8[%c0_16, %c0_17] : memref<32x32xf32, #tpu.memory_space<vmem>>, vector<32x32xf32>
    %cst_18 = arith.constant 0.000000e+00 : f32
    %18 = vector.broadcast %cst_18 : f32 to vector<8x32xf32>
    %19 = vector.extract_strided_slice %6 {offsets = [0, 0], sizes = [8, 8], strides = [1, 1]} : vector<8x32xf32> to vector<8x8xf32>
    %20 = vector.extract_strided_slice %11 {offsets = [0, 0], sizes = [8, 8], strides = [1, 1]} : vector<8x32xf32> to vector<8x8xf32>
    %21 = vector.extract_strided_slice %16 {offsets = [0, 0], sizes = [8, 8], strides = [1, 1]} : vector<8x32xf32> to vector<8x8xf32>
    %cst_19 = arith.constant dense<0.000000e+00> : vector<8x8xf32>
    %22 = tpu.matmul %19, %20, %cst_19 {dimension_numbers = #tpu.dot_dimension_numbers<[1], [1], [0], [0], [0, 0, 1, 0], [], []>} : vector<8x8xf32>, vector<8x8xf32>, vector<8x8xf32> -> vector<8x8xf32>
    %cst_20 = arith.constant 0.353553385 : f32
    %23 = vector.broadcast %cst_20 : f32 to vector<8x8xf32>
    %24 = arith.mulf %22, %23 : vector<8x8xf32>
    %cst_21 = arith.constant dense<0xFF800000> : vector<8xf32>
    %25 = vector.multi_reduction <maximumf>, %24, %cst_21 [1] : vector<8x8xf32> to vector<8xf32>
    %26 = vector.shape_cast %25 : vector<8xf32> to vector<8x1xf32>
    %27 = vector.broadcast %26 : vector<8x1xf32> to vector<8x8xf32>
    %28 = arith.subf %24, %27 : vector<8x8xf32>
    %29 = math.exp %28 : vector<8x8xf32>
    %cst_22 = arith.constant dense<0.000000e+00> : vector<8xf32>
    %30 = vector.multi_reduction <add>, %29, %cst_22 [1] : vector<8x8xf32> to vector<8xf32>
    %31 = vector.shape_cast %30 : vector<8xf32> to vector<8x1xf32>
    %32 = tpu.reciprocal %31 {approx = true} : vector<8x1xf32> -> vector<8x1xf32>
    %33 = vector.broadcast %32 : vector<8x1xf32> to vector<8x8xf32>
    %34 = arith.mulf %29, %33 : vector<8x8xf32>
    %cst_23 = arith.constant dense<0.000000e+00> : vector<8x8xf32>
    %35 = tpu.matmul %34, %21, %cst_23 {dimension_numbers = #tpu.dot_dimension_numbers<[1], [0], [0], [1], [0, 0, 1, 1], [], []>} : vector<8x8xf32>, vector<8x8xf32>, vector<8x8xf32> -> vector<8x8xf32>
    %36 = vector.extract_strided_slice %17 {offsets = [0, 0], sizes = [8, 32], strides = [1, 1]} : vector<32x32xf32> to vector<8x32xf32>
    %cst_24 = arith.constant dense<0.000000e+00> : vector<8x32xf32>
    %37 = tpu.matmul %35, %36, %cst_24 {dimension_numbers = #tpu.dot_dimension_numbers<[1], [0], [0], [1], [0, 0, 1, 1], [], []>} : vector<8x8xf32>, vector<8x32xf32>, vector<8x32xf32> -> vector<8x32xf32>
    %38 = arith.addf %18, %37 : vector<8x32xf32>
    %39 = vector.extract_strided_slice %6 {offsets = [0, 8], sizes = [8, 8], strides = [1, 1]} : vector<8x32xf32> to vector<8x8xf32>
    %40 = vector.extract_strided_slice %11 {offsets = [0, 8], sizes = [8, 8], strides = [1, 1]} : vector<8x32xf32> to vector<8x8xf32>
    %41 = vector.extract_strided_slice %16 {offsets = [0, 8], sizes = [8, 8], strides = [1, 1]} : vector<8x32xf32> to vector<8x8xf32>
    %cst_25 = arith.constant dense<0.000000e+00> : vector<8x8xf32>
    %42 = tpu.matmul %39, %40, %cst_25 {dimension_numbers = #tpu.dot_dimension_numbers<[1], [1], [0], [0], [0, 0, 1, 0], [], []>} : vector<8x8xf32>, vector<8x8xf32>, vector<8x8xf32> -> vector<8x8xf32>
    %cst_26 = arith.constant 0.353553385 : f32
    %43 = vector.broadcast %cst_26 : f32 to vector<8x8xf32>
    %44 = arith.mulf %42, %43 : vector<8x8xf32>
    %cst_27 = arith.constant dense<0xFF800000> : vector<8xf32>
    %45 = vector.multi_reduction <maximumf>, %44, %cst_27 [1] : vector<8x8xf32> to vector<8xf32>
    %46 = vector.shape_cast %45 : vector<8xf32> to vector<8x1xf32>
    %47 = vector.broadcast %46 : vector<8x1xf32> to vector<8x8xf32>
    %48 = arith.subf %44, %47 : vector<8x8xf32>
    %49 = math.exp %48 : vector<8x8xf32>
    %cst_28 = arith.constant dense<0.000000e+00> : vector<8xf32>
    %50 = vector.multi_reduction <add>, %49, %cst_28 [1] : vector<8x8xf32> to vector<8xf32>
    %51 = vector.shape_cast %50 : vector<8xf32> to vector<8x1xf32>
    %52 = tpu.reciprocal %51 {approx = true} : vector<8x1xf32> -> vector<8x1xf32>
    %53 = vector.broadcast %52 : vector<8x1xf32> to vector<8x8xf32>
    %54 = arith.mulf %49, %53 : vector<8x8xf32>
    %cst_29 = arith.constant dense<0.000000e+00> : vector<8x8xf32>
    %55 = tpu.matmul %54, %41, %cst_29 {dimension_numbers = #tpu.dot_dimension_numbers<[1], [0], [0], [1], [0, 0, 1, 1], [], []>} : vector<8x8xf32>, vector<8x8xf32>, vector<8x8xf32> -> vector<8x8xf32>
    %56 = vector.extract_strided_slice %17 {offsets = [8, 0], sizes = [8, 32], strides = [1, 1]} : vector<32x32xf32> to vector<8x32xf32>
    %cst_30 = arith.constant dense<0.000000e+00> : vector<8x32xf32>
    %57 = tpu.matmul %55, %56, %cst_30 {dimension_numbers = #tpu.dot_dimension_numbers<[1], [0], [0], [1], [0, 0, 1, 1], [], []>} : vector<8x8xf32>, vector<8x32xf32>, vector<8x32xf32> -> vector<8x32xf32>
    %58 = arith.addf %38, %57 : vector<8x32xf32>
    %59 = vector.extract_strided_slice %6 {offsets = [0, 16], sizes = [8, 8], strides = [1, 1]} : vector<8x32xf32> to vector<8x8xf32>
    %60 = vector.extract_strided_slice %11 {offsets = [0, 16], sizes = [8, 8], strides = [1, 1]} : vector<8x32xf32> to vector<8x8xf32>
    %61 = vector.extract_strided_slice %16 {offsets = [0, 16], sizes = [8, 8], strides = [1, 1]} : vector<8x32xf32> to vector<8x8xf32>
    %cst_31 = arith.constant dense<0.000000e+00> : vector<8x8xf32>
    %62 = tpu.matmul %59, %60, %cst_31 {dimension_numbers = #tpu.dot_dimension_numbers<[1], [1], [0], [0], [0, 0, 1, 0], [], []>} : vector<8x8xf32>, vector<8x8xf32>, vector<8x8xf32> -> vector<8x8xf32>
    %cst_32 = arith.constant 0.353553385 : f32
    %63 = vector.broadcast %cst_32 : f32 to vector<8x8xf32>
    %64 = arith.mulf %62, %63 : vector<8x8xf32>
    %cst_33 = arith.constant dense<0xFF800000> : vector<8xf32>
    %65 = vector.multi_reduction <maximumf>, %64, %cst_33 [1] : vector<8x8xf32> to vector<8xf32>
    %66 = vector.shape_cast %65 : vector<8xf32> to vector<8x1xf32>
    %67 = vector.broadcast %66 : vector<8x1xf32> to vector<8x8xf32>
    %68 = arith.subf %64, %67 : vector<8x8xf32>
    %69 = math.exp %68 : vector<8x8xf32>
    %cst_34 = arith.constant dense<0.000000e+00> : vector<8xf32>
    %70 = vector.multi_reduction <add>, %69, %cst_34 [1] : vector<8x8xf32> to vector<8xf32>
    %71 = vector.shape_cast %70 : vector<8xf32> to vector<8x1xf32>
    %72 = tpu.reciprocal %71 {approx = true} : vector<8x1xf32> -> vector<8x1xf32>
    %73 = vector.broadcast %72 : vector<8x1xf32> to vector<8x8xf32>
    %74 = arith.mulf %69, %73 : vector<8x8xf32>
    %cst_35 = arith.constant dense<0.000000e+00> : vector<8x8xf32>
    %75 = tpu.matmul %74, %61, %cst_35 {dimension_numbers = #tpu.dot_dimension_numbers<[1], [0], [0], [1], [0, 0, 1, 1], [], []>} : vector<8x8xf32>, vector<8x8xf32>, vector<8x8xf32> -> vector<8x8xf32>
    %76 = vector.extract_strided_slice %17 {offsets = [16, 0], sizes = [8, 32], strides = [1, 1]} : vector<32x32xf32> to vector<8x32xf32>
    %cst_36 = arith.constant dense<0.000000e+00> : vector<8x32xf32>
    %77 = tpu.matmul %75, %76, %cst_36 {dimension_numbers = #tpu.dot_dimension_numbers<[1], [0], [0], [1], [0, 0, 1, 1], [], []>} : vector<8x8xf32>, vector<8x32xf32>, vector<8x32xf32> -> vector<8x32xf32>
    %78 = arith.addf %58, %77 : vector<8x32xf32>
    %79 = vector.extract_strided_slice %6 {offsets = [0, 24], sizes = [8, 8], strides = [1, 1]} : vector<8x32xf32> to vector<8x8xf32>
    %80 = vector.extract_strided_slice %11 {offsets = [0, 24], sizes = [8, 8], strides = [1, 1]} : vector<8x32xf32> to vector<8x8xf32>
    %81 = vector.extract_strided_slice %16 {offsets = [0, 24], sizes = [8, 8], strides = [1, 1]} : vector<8x32xf32> to vector<8x8xf32>
    %cst_37 = arith.constant dense<0.000000e+00> : vector<8x8xf32>
    %82 = tpu.matmul %79, %80, %cst_37 {dimension_numbers = #tpu.dot_dimension_numbers<[1], [1], [0], [0], [0, 0, 1, 0], [], []>} : vector<8x8xf32>, vector<8x8xf32>, vector<8x8xf32> -> vector<8x8xf32>
    %cst_38 = arith.constant 0.353553385 : f32
    %83 = vector.broadcast %cst_38 : f32 to vector<8x8xf32>
    %84 = arith.mulf %82, %83 : vector<8x8xf32>
    %cst_39 = arith.constant dense<0xFF800000> : vector<8xf32>
    %85 = vector.multi_reduction <maximumf>, %84, %cst_39 [1] : vector<8x8xf32> to vector<8xf32>
    %86 = vector.shape_cast %85 : vector<8xf32> to vector<8x1xf32>
    %87 = vector.broadcast %86 : vector<8x1xf32> to vector<8x8xf32>
    %88 = arith.subf %84, %87 : vector<8x8xf32>
    %89 = math.exp %88 : vector<8x8xf32>
    %cst_40 = arith.constant dense<0.000000e+00> : vector<8xf32>
    %90 = vector.multi_reduction <add>, %89, %cst_40 [1] : vector<8x8xf32> to vector<8xf32>
    %91 = vector.shape_cast %90 : vector<8xf32> to vector<8x1xf32>
    %92 = tpu.reciprocal %91 {approx = true} : vector<8x1xf32> -> vector<8x1xf32>
    %93 = vector.broadcast %92 : vector<8x1xf32> to vector<8x8xf32>
    %94 = arith.mulf %89, %93 : vector<8x8xf32>
    %cst_41 = arith.constant dense<0.000000e+00> : vector<8x8xf32>
    %95 = tpu.matmul %94, %81, %cst_41 {dimension_numbers = #tpu.dot_dimension_numbers<[1], [0], [0], [1], [0, 0, 1, 1], [], []>} : vector<8x8xf32>, vector<8x8xf32>, vector<8x8xf32> -> vector<8x8xf32>
    %96 = vector.extract_strided_slice %17 {offsets = [24, 0], sizes = [8, 32], strides = [1, 1]} : vector<32x32xf32> to vector<8x32xf32>
    %cst_42 = arith.constant dense<0.000000e+00> : vector<8x32xf32>
    %97 = tpu.matmul %95, %96, %cst_42 {dimension_numbers = #tpu.dot_dimension_numbers<[1], [0], [0], [1], [0, 0, 1, 1], [], []>} : vector<8x8xf32>, vector<8x32xf32>, vector<8x32xf32> -> vector<8x32xf32>
    %98 = arith.addf %78, %97 : vector<8x32xf32>
    %c0_43 = arith.constant 0 : index
    %c0_44 = arith.constant 0 : index
    %99 = vector.load %arg9[%c0_43, %c0_44] : memref<1x32xf32, #tpu.memory_space<vmem>>, vector<1x32xf32>
    %100 = vector.broadcast %99 : vector<1x32xf32> to vector<8x32xf32>
    %101 = arith.addf %98, %100 : vector<8x32xf32>
    %c0_45 = arith.constant 0 : index
    %c0_46 = arith.constant 0 : index
    %c0_47 = arith.constant 0 : index
    %102 = vector.load %arg10[%c0_45, %c0_46, %c0_47] : memref<1x8x32xf32, #tpu.memory_space<vmem>>, vector<1x8x32xf32>
    %103 = vector.shape_cast %102 : vector<1x8x32xf32> to vector<8x32xf32>
    %104 = vector.shape_cast %101 : vector<8x32xf32> to vector<1x8x32xf32>
    tpu.vector_store %arg10[%c0_45, %c0_46, %c0_47], %104 {strides = array<i32>} : memref<1x8x32xf32, #tpu.memory_space<vmem>>, vector<1x8x32xf32>,
    return
  }
  func.func @transform_0(%arg0: i32) -> (i32, i32, i32) {
    %c0_i32 = arith.constant 0 : i32
    %c0_i32_0 = arith.constant 0 : i32
    %c0_i32_1 = arith.constant 0 : i32
    return %arg0, %c0_i32, %c0_i32_0 : i32, i32, i32
  }
  func.func @transform_1(%arg0: i32) -> (i32, i32) {
    %c0_i32 = arith.constant 0 : i32
    %c0_i32_0 = arith.constant 0 : i32
    %c0_i32_1 = arith.constant 0 : i32
    return %c0_i32, %c0_i32_0 : i32, i32
  }
  func.func @transform_2(%arg0: i32) -> (i32, i32) {
    %c0_i32 = arith.constant 0 : i32
    %c0_i32_0 = arith.constant 0 : i32
    %c0_i32_1 = arith.constant 0 : i32
    return %c0_i32, %c0_i32_0 : i32, i32
  }
  func.func @transform_3(%arg0: i32) -> (i32, i32) {
    %c0_i32 = arith.constant 0 : i32
    %c0_i32_0 = arith.constant 0 : i32
    %c0_i32_1 = arith.constant 0 : i32
    return %c0_i32, %c0_i32_0 : i32, i32
  }
  func.func @transform_4(%arg0: i32) -> (i32, i32) {
    %c0_i32 = arith.constant 0 : i32
    %c0_i32_0 = arith.constant 0 : i32
    %c0_i32_1 = arith.constant 0 : i32
    return %c0_i32, %c0_i32_0 : i32, i32
  }
  func.func @transform_5(%arg0: i32) -> (i32, i32) {
    %c0_i32 = arith.constant 0 : i32
    %c0_i32_0 = arith.constant 0 : i32
    %c0_i32_1 = arith.constant 0 : i32
    return %c0_i32, %c0_i32_0 : i32, i32
  }
  func.func @transform_6(%arg0: i32) -> (i32, i32) {
    %c0_i32 = arith.constant 0 : i32
    %c0_i32_0 = arith.constant 0 : i32
    %c0_i32_1 = arith.constant 0 : i32
    return %c0_i32, %c0_i32_0 : i32, i32
  }
  func.func @transform_7(%arg0: i32) -> (i32, i32) {
    %c0_i32 = arith.constant 0 : i32
    %c0_i32_0 = arith.constant 0 : i32
    %c0_i32_1 = arith.constant 0 : i32
    return %c0_i32, %c0_i32_0 : i32, i32
  }
  func.func @transform_8(%arg0: i32) -> (i32, i32) {
    %c0_i32 = arith.constant 0 : i32
    %c0_i32_0 = arith.constant 0 : i32
    %c0_i32_1 = arith.constant 0 : i32
    return %c0_i32, %c0_i32_0 : i32, i32
  }
  func.func @transform_9(%arg0: i32) -> (i32, i32, i32) {
    %c0_i32 = arith.constant 0 : i32
    %c0_i32_0 = arith.constant 0 : i32
    %c0_i32_1 = arith.constant 0 : i32
    return %arg0, %c0_i32, %c0_i32_0 : i32, i32, i32
  }
}

</mosaic_0001>

<llo_original>
// kernel: self_attention_forward.1
$region0: #{self_attention_forward.1}
  #allocation0 [shape = 'u32[]', space=smem, size = 0x4, offset = 0x4, fixed_abs, tag = 'smem constant byte address 0x4 - core index']
  #allocation1 [shape = 'u32[144,128]{1,0:T(1,128)}', space=vmem, size = 0x12000, scoped, tag = 'internal scratch']
  %s0 = inlined_call_operand.hbm [shape: f32[2,8,32], index: 0, kind: input, shape index: {}]
  %s1 = inlined_call_operand.hbm [shape: f32[32,32], index: 1, kind: input, shape index: {}]
  %s2 = inlined_call_operand.vmem [shape: f32[1,32], index: 2, kind: input, shape index: {}]
  %s3 = inlined_call_operand.hbm [shape: f32[32,32], index: 3, kind: input, shape index: {}]
  %s4 = inlined_call_operand.vmem [shape: f32[1,32], index: 4, kind: input, shape index: {}]
  %s5 = inlined_call_operand.hbm [shape: f32[32,32], index: 5, kind: input, shape index: {}]
  %s6 = inlined_call_operand.vmem [shape: f32[1,32], index: 6, kind: input, shape index: {}]
  %s7 = inlined_call_operand.hbm [shape: f32[32,32], index: 7, kind: input, shape index: {}]
  %s8 = inlined_call_operand.vmem [shape: f32[1,32], index: 8, kind: input, shape index: {}]
  %s9 = inlined_call_operand.hbm [shape: f32[2,8,32], index: 9, kind: output, shape index: {}]
  %s10 = sld [smem:[#allocation0]]
  $region89: #{self_attention_forward.1} parent=0
    _
  %s12 = ssub.s32 1, %s10
  %s13 = scalar_select 0, %s12, %s10
  $region1: #{self_attention_forward.1} parent=0
    #allocation2 [shape = 'u8[8192]{0}', space=vmem, size = 0x2000, scoped, tag = 'input window, operand 0']
    #allocation3 [shape = 's32[2]{0}', space=sflag, size = 0x8, scoped, tag = 'scoped memory for self_attention_forward.1']
    #allocation4 [shape = 's32[2]{0}', space=sflag, size = 0x8, scoped, tag = 'scoped memory for self_attention_forward.1']
    #allocation5 [shape = 'u8[16384]{0}', space=vmem, size = 0x4000, scoped, tag = 'input window, operand 1, single buffered']
    #allocation6 [shape = 's32[1]{0}', space=sflag, size = 0x4, scoped, tag = 'scoped memory for self_attention_forward.1']
    #allocation7 [shape = 'u8[16384]{0}', space=vmem, size = 0x4000, scoped, tag = 'input window, operand 3, single buffered']
    #allocation8 [shape = 'u8[16384]{0}', space=vmem, size = 0x4000, scoped, tag = 'input window, operand 5, single buffered']
    #allocation9 [shape = 's32[1]{0}', space=sflag, size = 0x4, scoped, tag = 'scoped memory for self_attention_forward.1']
    #allocation10 [shape = 'u8[16384]{0}', space=vmem, size = 0x4000, scoped, tag = 'input window, operand 7, single buffered']
    #allocation11 [shape = 'u8[8192]{0}', space=vmem, size = 0x2000, scoped, tag = 'output window, operand 0']
    %14 = vsyncpa [#allocation3], 0
    %s15 = scalar_lea.sflag [#allocation3], 1
    %16 = vsyncpa %s15, 0
    %17 = vsyncpa [#allocation6], 0
    %18 = vsyncpa [#allocation9], 0
    %19 = vsyncpa [#allocation4], 0
    %s20 = scalar_lea.sflag [#allocation4], 1
    %21 = vsyncpa %s20, 0
    loop: start=0, step=1, limit=4
    $region2: #{self_attention_forward.1} parent=1 // loop_pre_header
      _
    $region3: #{self_attention_forward.1} parent=1 // loop_header
      %s23 = sphi 0, %s27
      %p24 = scmp.ge.s32.totalorder %s23, 4
      %s33 = sphi 0, %s35
      %s36 = sphi 0, %s33
      %s37 = sphi 0, %s36
      %s53 = sphi 0, %s37
      %s57 = sphi 0, %s57
      %s59 = sphi 0, %s57
      %s60 = sphi 0, %s59
      %s74 = sphi 0, %s60
      %s78 = sphi 0, %s78
      %s80 = sphi 0, %s78
      %s81 = sphi 0, %s80
      %s95 = sphi 0, %s81
      %s99 = sphi 0, %s99
      %s101 = sphi 0, %s99
      %s102 = sphi 0, %s101
      %s116 = sphi 0, %s102
      %s120 = sphi 0, %s120
      %s122 = sphi 0, %s120
      %s123 = sphi 0, %s122
      %s137 = sphi 0, %s123
      %s141 = sphi 0, %s141
      %s143 = sphi 0, %s141
      %s144 = sphi 0, %s143
      %s158 = sphi 0, %s144
      %s162 = sphi 0, %s162
      %s164 = sphi 0, %s162
      %s165 = sphi 0, %s164
      %s179 = sphi 0, %s165
      %s183 = sphi 0, %s183
      %s185 = sphi 0, %s183
      %s186 = sphi 0, %s185
      %s200 = sphi 0, %s186
      %s204 = sphi 0, %s204
      %s206 = sphi 0, %s204
      %s207 = sphi 0, %s206
      %s221 = sphi 0, %s207
      %s227 = sphi 0, %s229
      %s230 = sphi 0, %s227
      %s231 = sphi 0, %s230
      %s247 = sphi 0, %s231
    $region4: #{self_attention_forward.1} parent=1 // loop_header_branch
      %26 = sbr.rel (%p24) target = $region8
    $region5: #{self_attention_forward.1} parent=1 // loop_body
      %s28 = ssub.s32 %s23, 1
      %s29 = ssub.s32 %s23, 2
      %s30 = sadd.s32 %s23, 1
      %s31 = ssub.s32 %s23, %s30
      %p32 = scmp.eq.s32.totalorder %s31, 0
      %s34 = sadd.s32 %s33, 1
      %s35 = scalar_select %p32, %s33, %s34
      %p38 = pneg %p32
      %p39 = scmp.eq.s32.totalorder %s23, 1
      %p40 = por %p38, %p39
      %p41 = scmp.ne.s32.totalorder %s33, %s36
      %p42 = scmp.eq.s32.totalorder %s23, 0
      %p43 = por %p41, %p42
      %p44 = scmp.ne.s32.totalorder %s33, %s36
      %p45 = scmp.eq.s32.totalorder %s28, 1
      %p46 = por %p44, %p45
      %p47 = scmp.ne.s32.totalorder %s36, %s37
      %p48 = scmp.eq.s32.totalorder %s28, 0
      %p49 = por %p47, %p48
      %p50 = scmp.ne.s32.totalorder %s36, %s37
      %p51 = scmp.eq.s32.totalorder %s29, 1
      %p52 = por %p50, %p51
      %p54 = scmp.ne.s32.totalorder %s37, %s53
      %p55 = scmp.eq.s32.totalorder %s29, 0
      %p56 = por %p54, %p55
      %s58 = sadd.s32 %s57, 1
      %p61 = scmp.eq.s32.totalorder %s23, 1
      %p62 = scmp.ne.s32.totalorder %s57, %s59
      %p63 = scmp.eq.s32.totalorder %s23, 0
      %p64 = por %p62, %p63
      %p65 = scmp.ne.s32.totalorder %s57, %s59
      %p66 = scmp.eq.s32.totalorder %s28, 1
      %p67 = por %p65, %p66
      %p68 = scmp.ne.s32.totalorder %s59, %s60
      %p69 = scmp.eq.s32.totalorder %s28, 0
      %p70 = por %p68, %p69
      %p71 = scmp.ne.s32.totalorder %s59, %s60
      %p72 = scmp.eq.s32.totalorder %s29, 1
      %p73 = por %p71, %p72
      %p75 = scmp.ne.s32.totalorder %s60, %s74
      %p76 = scmp.eq.s32.totalorder %s29, 0
      %p77 = por %p75, %p76
      %s79 = sadd.s32 %s78, 1
      %p82 = scmp.eq.s32.totalorder %s23, 1
      %p83 = scmp.ne.s32.totalorder %s78, %s80
      %p84 = scmp.eq.s32.totalorder %s23, 0
      %p85 = por %p83, %p84
      %p86 = scmp.ne.s32.totalorder %s78, %s80
      %p87 = scmp.eq.s32.totalorder %s28, 1
      %p88 = por %p86, %p87
      %p89 = scmp.ne.s32.totalorder %s80, %s81
      %p90 = scmp.eq.s32.totalorder %s28, 0
      %p91 = por %p89, %p90
      %p92 = scmp.ne.s32.totalorder %s80, %s81
      %p93 = scmp.eq.s32.totalorder %s29, 1
      %p94 = por %p92, %p93
      %p96 = scmp.ne.s32.totalorder %s81, %s95
      %p97 = scmp.eq.s32.totalorder %s29, 0
      %p98 = por %p96, %p97
      %s100 = sadd.s32 %s99, 1
      %p103 = scmp.eq.s32.totalorder %s23, 1
      %p104 = scmp.ne.s32.totalorder %s99, %s101
      %p105 = scmp.eq.s32.totalorder %s23, 0
      %p106 = por %p104, %p105
      %p107 = scmp.ne.s32.totalorder %s99, %s101
      %p108 = scmp.eq.s32.totalorder %s28, 1
      %p109 = por %p107, %p108
      %p110 = scmp.ne.s32.totalorder %s101, %s102
      %p111 = scmp.eq.s32.totalorder %s28, 0
      %p112 = por %p110, %p111
      %p113 = scmp.ne.s32.totalorder %s101, %s102
      %p114 = scmp.eq.s32.totalorder %s29, 1
      %p115 = por %p113, %p114
      %p117 = scmp.ne.s32.totalorder %s102, %s116
      %p118 = scmp.eq.s32.totalorder %s29, 0
      %p119 = por %p117, %p118
      %s121 = sadd.s32 %s120, 1
      %p124 = scmp.eq.s32.totalorder %s23, 1
      %p125 = scmp.ne.s32.totalorder %s120, %s122
      %p126 = scmp.eq.s32.totalorder %s23, 0
      %p127 = por %p125, %p126
      %p128 = scmp.ne.s32.totalorder %s120, %s122
      %p129 = scmp.eq.s32.totalorder %s28, 1
      %p130 = por %p128, %p129
      %p131 = scmp.ne.s32.totalorder %s122, %s123
      %p132 = scmp.eq.s32.totalorder %s28, 0
      %p133 = por %p131, %p132
      %p134 = scmp.ne.s32.totalorder %s122, %s123
      %p135 = scmp.eq.s32.totalorder %s29, 1
      %p136 = por %p134, %p135
      %p138 = scmp.ne.s32.totalorder %s123, %s137
      %p139 = scmp.eq.s32.totalorder %s29, 0
      %p140 = por %p138, %p139
      %s142 = sadd.s32 %s141, 1
      %p145 = scmp.eq.s32.totalorder %s23, 1
      %p146 = scmp.ne.s32.totalorder %s141, %s143
      %p147 = scmp.eq.s32.totalorder %s23, 0
      %p148 = por %p146, %p147
      %p149 = scmp.ne.s32.totalorder %s141, %s143
      %p150 = scmp.eq.s32.totalorder %s28, 1
      %p151 = por %p149, %p150
      %p152 = scmp.ne.s32.totalorder %s143, %s144
      %p153 = scmp.eq.s32.totalorder %s28, 0
      %p154 = por %p152, %p153
      %p155 = scmp.ne.s32.totalorder %s143, %s144
      %p156 = scmp.eq.s32.totalorder %s29, 1
      %p157 = por %p155, %p156
      %p159 = scmp.ne.s32.totalorder %s144, %s158
      %p160 = scmp.eq.s32.totalorder %s29, 0
      %p161 = por %p159, %p160
      %s163 = sadd.s32 %s162, 1
      %p166 = scmp.eq.s32.totalorder %s23, 1
      %p167 = scmp.ne.s32.totalorder %s162, %s164
      %p168 = scmp.eq.s32.totalorder %s23, 0
      %p169 = por %p167, %p168
      %p170 = scmp.ne.s32.totalorder %s162, %s164
      %p171 = scmp.eq.s32.totalorder %s28, 1
      %p172 = por %p170, %p171
      %p173 = scmp.ne.s32.totalorder %s164, %s165
      %p174 = scmp.eq.s32.totalorder %s28, 0
      %p175 = por %p173, %p174
      %p176 = scmp.ne.s32.totalorder %s164, %s165
      %p177 = scmp.eq.s32.totalorder %s29, 1
      %p178 = por %p176, %p177
      %p180 = scmp.ne.s32.totalorder %s165, %s179
      %p181 = scmp.eq.s32.totalorder %s29, 0
      %p182 = por %p180, %p181
      %s184 = sadd.s32 %s183, 1
      %p187 = scmp.eq.s32.totalorder %s23, 1
      %p188 = scmp.ne.s32.totalorder %s183, %s185
      %p189 = scmp.eq.s32.totalorder %s23, 0
      %p190 = por %p188, %p189
      %p191 = scmp.ne.s32.totalorder %s183, %s185
      %p192 = scmp.eq.s32.totalorder %s28, 1
      %p193 = por %p191, %p192
      %p194 = scmp.ne.s32.totalorder %s185, %s186
      %p195 = scmp.eq.s32.totalorder %s28, 0
      %p196 = por %p194, %p195
      %p197 = scmp.ne.s32.totalorder %s185, %s186
      %p198 = scmp.eq.s32.totalorder %s29, 1
      %p199 = por %p197, %p198
      %p201 = scmp.ne.s32.totalorder %s186, %s200
      %p202 = scmp.eq.s32.totalorder %s29, 0
      %p203 = por %p201, %p202
      %s205 = sadd.s32 %s204, 1
      %p208 = scmp.eq.s32.totalorder %s23, 1
      %p209 = scmp.ne.s32.totalorder %s204, %s206
      %p210 = scmp.eq.s32.totalorder %s23, 0
      %p211 = por %p209, %p210
      %p212 = scmp.ne.s32.totalorder %s204, %s206
      %p213 = scmp.eq.s32.totalorder %s28, 1
      %p214 = por %p212, %p213
      %p215 = scmp.ne.s32.totalorder %s206, %s207
      %p216 = scmp.eq.s32.totalorder %s28, 0
      %p217 = por %p215, %p216
      %p218 = scmp.ne.s32.totalorder %s206, %s207
      %p219 = scmp.eq.s32.totalorder %s29, 1
      %p220 = por %p218, %p219
      %p222 = scmp.ne.s32.totalorder %s207, %s221
      %p223 = scmp.eq.s32.totalorder %s29, 0
      %p224 = por %p222, %p223
      %s225 = ssub.s32 %s23, %s30
      %p226 = scmp.eq.s32.totalorder %s225, 0
      %s228 = sadd.s32 %s227, 1
      %s229 = scalar_select %p226, %s227, %s228
      %p232 = pneg %p226
      %p233 = scmp.eq.s32.totalorder %s23, 1
      %p234 = por %p232, %p233
      %p235 = scmp.ne.s32.totalorder %s227, %s230
      %p236 = scmp.eq.s32.totalorder %s23, 0
      %p237 = por %p235, %p236
      %p238 = scmp.ne.s32.totalorder %s227, %s230
      %p239 = scmp.eq.s32.totalorder %s28, 1
      %p240 = por %p238, %p239
      %p241 = scmp.ne.s32.totalorder %s230, %s231
      %p242 = scmp.eq.s32.totalorder %s28, 0
      %p243 = por %p241, %p242
      %p244 = scmp.ne.s32.totalorder %s230, %s231
      %p245 = scmp.eq.s32.totalorder %s29, 1
      %p246 = por %p244, %p245
      %p248 = scmp.ne.s32.totalorder %s231, %s247
      %p249 = scmp.eq.s32.totalorder %s29, 0
      %p250 = por %p248, %p249
      %p251 = scmp.le.s32.totalorder 1, %s23
      %p252 = scmp.lt.s32.totalorder %s23, 3
      %p253 = pnand %p251, %p252
      %p254 = pneg %p253
      // Predicated region
      $region9: #{self_attention_forward.1} parent=5 // pred_check
        _
      $region10: #{self_attention_forward.1} parent=5 // pred_check_branch
        %256 = sbr.rel (%p253) target = $region12
      $region11: #{self_attention_forward.1} parent=5 // pred_region
        %s257 = ssub.s32 %s23, 1
        // Predicated region
        $region13: #{self_attention_forward.1} parent=11 // pred_check
          %p258 = pneg %p70
        $region14: #{self_attention_forward.1} parent=11 // pred_check_branch
          %260 = sbr.rel (%p258) target = $region16
        $region15: #{self_attention_forward.1} parent=11 // pred_region
          %s262 = ssub.s32 512, 512
          %263 = vsyncadd [#allocation6], %s262
          %s264 = sshll.u32 [#allocation5], 4
          %s265 = int_to_ptr.vmem [resolvable:$true] %s264
          %270 = dma.hbm_to_vmem [thread:$0]  %s1, 512, %s265, [#allocation6], 128, 128, 8
        $region16: #{self_attention_forward.1} parent=11 // pred_fallthru
          _
        // Predicated region
        $region17: #{self_attention_forward.1} parent=11 // pred_check
          %p271 = pneg %p91
        $region18: #{self_attention_forward.1} parent=11 // pred_check_branch
          %273 = sbr.rel (%p271) target = $region20
        $region19: #{self_attention_forward.1} parent=11 // pred_region
          _
        $region20: #{self_attention_forward.1} parent=11 // pred_fallthru
          _
        // Predicated region
        $region21: #{self_attention_forward.1} parent=11 // pred_check
          %p274 = pneg %p112
        $region22: #{self_attention_forward.1} parent=11 // pred_check_branch
          %276 = sbr.rel (%p274) target = $region24
        $region23: #{self_attention_forward.1} parent=11 // pred_region
          %s278 = ssub.s32 512, 512
          %279 = vsyncadd [#allocation6], %s278
          %s280 = sshll.u32 [#allocation7], 4
          %s281 = int_to_ptr.vmem [resolvable:$true] %s280
          %286 = dma.hbm_to_vmem [thread:$0]  %s3, 512, %s281, [#allocation6], 128, 128, 8
        $region24: #{self_attention_forward.1} parent=11 // pred_fallthru
          _
        // Predicated region
        $region25: #{self_attention_forward.1} parent=11 // pred_check
          %p287 = pneg %p133
        $region26: #{self_attention_forward.1} parent=11 // pred_check_branch
          %289 = sbr.rel (%p287) target = $region28
        $region27: #{self_attention_forward.1} parent=11 // pred_region
          _
        $region28: #{self_attention_forward.1} parent=11 // pred_fallthru
          _
        // Predicated region
        $region29: #{self_attention_forward.1} parent=11 // pred_check
          %p290 = pneg %p154
        $region30: #{self_attention_forward.1} parent=11 // pred_check_branch
          %292 = sbr.rel (%p290) target = $region32
        $region31: #{self_attention_forward.1} parent=11 // pred_region
          %s294 = ssub.s32 512, 512
          %295 = vsyncadd [#allocation9], %s294
          %s296 = sshll.u32 [#allocation8], 4
          %s297 = int_to_ptr.vmem [resolvable:$true] %s296
          %302 = dma.hbm_to_vmem [thread:$0]  %s5, 512, %s297, [#allocation9], 128, 128, 8
        $region32: #{self_attention_forward.1} parent=11 // pred_fallthru
          _
        // Predicated region
        $region33: #{self_attention_forward.1} parent=11 // pred_check
          %p303 = pneg %p175
        $region34: #{self_attention_forward.1} parent=11 // pred_check_branch
          %305 = sbr.rel (%p303) target = $region36
        $region35: #{self_attention_forward.1} parent=11 // pred_region
          _
        $region36: #{self_attention_forward.1} parent=11 // pred_fallthru
          _
        // Predicated region
        $region37: #{self_attention_forward.1} parent=11 // pred_check
          %p306 = pneg %p196
        $region38: #{self_attention_forward.1} parent=11 // pred_check_branch
          %308 = sbr.rel (%p306) target = $region40
        $region39: #{self_attention_forward.1} parent=11 // pred_region
          %s310 = ssub.s32 512, 512
          %311 = vsyncadd [#allocation9], %s310
          %s312 = sshll.u32 [#allocation10], 4
          %s313 = int_to_ptr.vmem [resolvable:$true] %s312
          %318 = dma.hbm_to_vmem [thread:$0]  %s7, 512, %s313, [#allocation9], 128, 128, 8
        $region40: #{self_attention_forward.1} parent=11 // pred_fallthru
          _
        // Predicated region
        $region41: #{self_attention_forward.1} parent=11 // pred_check
          %p319 = pneg %p217
        $region42: #{self_attention_forward.1} parent=11 // pred_check_branch
          %321 = sbr.rel (%p319) target = $region44
        $region43: #{self_attention_forward.1} parent=11 // pred_region
          _
        $region44: #{self_attention_forward.1} parent=11 // pred_fallthru
          _
      $region12: #{self_attention_forward.1} parent=5 // pred_fallthru
        _
      %p322 = scmp.lt.s32.totalorder %s23, 2
      // Predicated region
      $region45: #{self_attention_forward.1} parent=5 // pred_check
        %p323 = pneg %p322
      $region46: #{self_attention_forward.1} parent=5 // pred_check_branch
        %325 = sbr.rel (%p323) target = $region48
      $region47: #{self_attention_forward.1} parent=5 // pred_region
        // Predicated region
        $region49: #{self_attention_forward.1} parent=47 // pred_check
          %p326 = pneg %p43
        $region50: #{self_attention_forward.1} parent=47 // pred_check_branch
          %328 = sbr.rel (%p326) target = $region52
        $region51: #{self_attention_forward.1} parent=47 // pred_region
          %s329 = sand.u32 %s33, 1
          %s330 = scalar_lea.sflag [#allocation3], %s329
          %s331 = sand.u32 %s33, 1
          %s332 = smul.addr %s331, 8
          %s333 = scalar_lea.vmem [#allocation2], %s332
          %s335 = ssub.s32 128, 128
          %336 = vsyncadd %s330, %s335
          %s337 = smul.addr %s23, 128
          %s338 = scalar_lea.hbm %s0, %s337
          %s340 = sshll.u32 %s333, 4
          %s341 = int_to_ptr.vmem [resolvable:$true] %s340
          %343 = dma.hbm_to_vmem [thread:$0]  %s338, 128, %s341, %s330
        $region52: #{self_attention_forward.1} parent=47 // pred_fallthru
          _
      $region48: #{self_attention_forward.1} parent=5 // pred_fallthru
        _
      %p344 = scmp.le.s32.totalorder 1, %s23
      %p345 = scmp.lt.s32.totalorder %s23, 3
      %p346 = pnand %p344, %p345
      %p347 = pneg %p346
      // Predicated region
      $region53: #{self_attention_forward.1} parent=5 // pred_check
        _
      $region54: #{self_attention_forward.1} parent=5 // pred_check_branch
        %349 = sbr.rel (%p346) target = $region56
      $region55: #{self_attention_forward.1} parent=5 // pred_region
        %s350 = ssub.s32 %s23, 1
        %s351 = sand.u32 %s36, 1
        %s352 = scalar_lea.sflag [#allocation3], %s351
        %s353 = sand.u32 %s36, 1
        %s354 = smul.addr %s353, 8
        %s355 = scalar_lea.vmem [#allocation2], %s354
        // Predicated region
        $region57: #{self_attention_forward.1} parent=55 // pred_check
          %p356 = pneg %p49
        $region58: #{self_attention_forward.1} parent=55 // pred_check_branch
          %358 = sbr.rel (%p356) target = $region60
        $region59: #{self_attention_forward.1} parent=55 // pred_region
          %359 = dma.done %s352, 128
        $region60: #{self_attention_forward.1} parent=55 // pred_fallthru
          _
        // Predicated region
        $region61: #{self_attention_forward.1} parent=55 // pred_check
          %p360 = pneg %p70
        $region62: #{self_attention_forward.1} parent=55 // pred_check_branch
          %362 = sbr.rel (%p360) target = $region64
        $region63: #{self_attention_forward.1} parent=55 // pred_region
          %363 = dma.done [#allocation6], 512
        $region64: #{self_attention_forward.1} parent=55 // pred_fallthru
          _
        // Predicated region
        $region65: #{self_attention_forward.1} parent=55 // pred_check
          %p364 = pneg %p112
        $region66: #{self_attention_forward.1} parent=55 // pred_check_branch
          %366 = sbr.rel (%p364) target = $region68
        $region67: #{self_attention_forward.1} parent=55 // pred_region
          %367 = dma.done [#allocation6], 512
        $region68: #{self_attention_forward.1} parent=55 // pred_fallthru
          _
        // Predicated region
        $region69: #{self_attention_forward.1} parent=55 // pred_check
          %p368 = pneg %p154
        $region70: #{self_attention_forward.1} parent=55 // pred_check_branch
          %370 = sbr.rel (%p368) target = $region72
        $region71: #{self_attention_forward.1} parent=55 // pred_region
          %371 = dma.done [#allocation9], 512
        $region72: #{self_attention_forward.1} parent=55 // pred_fallthru
          _
        // Predicated region
        $region73: #{self_attention_forward.1} parent=55 // pred_check
          %p372 = pneg %p196
        $region74: #{self_attention_forward.1} parent=55 // pred_check_branch
          %374 = sbr.rel (%p372) target = $region76
        $region75: #{self_attention_forward.1} parent=55 // pred_region
          %375 = dma.done [#allocation9], 512
        $region76: #{self_attention_forward.1} parent=55 // pred_fallthru
          _
        %s376 = sand.u32 %s36, 1
        %s377 = scalar_lea.sflag [#allocation3], %s376
        %s378 = sand.u32 %s36, 1
        %s379 = smul.addr %s378, 8
        %s380 = scalar_lea.vmem [#allocation2], %s379
        %p381 = pneg %p49
        %p382 = pneg %p46
        %p383 = pneg %p70
        %p384 = pneg %p67
        %p385 = pneg %p91
        %p386 = pneg %p88
        %p387 = pneg %p112
        %p388 = pneg %p109
        %p389 = pneg %p133
        %p390 = pneg %p130
        %p391 = pneg %p154
        %p392 = pneg %p151
        %p393 = pneg %p175
        %p394 = pneg %p172
        %p395 = pneg %p196
        %p396 = pneg %p193
        %p397 = pneg %p217
        %p398 = pneg %p214
        %p399 = pneg %p243
        %p400 = pneg %p240
        %s401 = sand.u32 %s230, 1
        %s402 = scalar_lea.sflag [#allocation4], %s401
        %s403 = sand.u32 %s230, 1
        %s404 = smul.addr %s403, 8
        %s405 = scalar_lea.vmem [#allocation11], %s404
        %v406 = vld [vmem:[%s355] sm:$0xff]
        %v407 = vld [vmem:[#allocation5] sm:$0xff]
        %v408 = vld [vmem:[#allocation5 + $0x8] sm:$0xff]
        %v409 = vld [vmem:[#allocation5 + $0x10] sm:$0xff]
        %v410 = vld [vmem:[#allocation5 + $0x18] sm:$0xff]
        %v411 = vld [vmem:[%s2] sm:$0x1]
        %v413 = vlaneseq
        %v414 = vshrl.u32 %v413, 7
        %v415 = vsub.s32 0, %v414
        %v416 = vrot.slane %v411, %v415
        %vm418 = vcmask 261120
        %v420 = vsel %vm418, %v406, 0
        %422 = vmatprep.subr.mxu0 0.0
        %423 = vmatpush1.msra.mxu0 %v407
        %424 = vmatprep.subr.mxu0 0.0
        %425 = vmatpush1.msra.mxu0 %v408
        %426 = vmatprep.subr.mxu0 0.0
        %427 = vmatpush1.msra.mxu0 %v409
        %428 = vmatprep.subr.mxu0 0.0
        %429 = vmatpush1.msra.mxu0 %v410
        %430 = vmatprep.subr.mxu0 0.0
        %431 = vmatpush1.msra.mxu0 0.0
        %432 = vmatprep.subr.mxu0 0.0
        %433 = vmatpush1.msra.mxu0 0.0
        %434 = vmatprep.subr.mxu0 0.0
        %435 = vmatpush1.msra.mxu0 0.0
        %436 = vmatprep.subr.mxu0 0.0
        %437 = vmatpush1.msra.mxu0 0.0
        %438 = vmatprep.subr.mxu0 0.0
        %439 = vmatpush1.msra.mxu0 0.0
        %440 = vmatprep.subr.mxu0 0.0
        %441 = vmatpush1.msra.mxu0 0.0
        %442 = vmatprep.subr.mxu0 0.0
        %443 = vmatpush1.msra.mxu0 0.0
        %444 = vmatprep.subr.mxu0 0.0
        %445 = vmatpush1.msra.mxu0 0.0
        %446 = vmatprep.subr.mxu0 0.0
        %447 = vmatpush1.msra.mxu0 0.0
        %448 = vmatprep.subr.mxu0 0.0
        %449 = vmatpush1.msra.mxu0 0.0
        %450 = vmatprep.subr.mxu0 0.0
        %451 = vmatpush1.msra.mxu0 0.0
        %452 = vmatprep.subr.mxu0 0.0
        %453 = vmatpush1.msra.mxu0 0.0
        %454 = vmatprep.subr.mxu0 0.0
        %455 = vmatpush1.msra.mxu0 0.0
        %456 = vmatprep.subr.mxu0 0.0
        %457 = vmatpush1.msra.mxu0 0.0
        %458 = vmatprep.subr.mxu0 0.0
        %459 = vmatpush1.msra.mxu0 0.0
        %460 = vmatprep.subr.mxu0 0.0
        %461 = vmatpush1.msra.mxu0 0.0
        %462 = vmatprep.subr.mxu0 0.0
        %463 = vmatpush1.msra.mxu0 0.0
        %464 = vmatprep.subr.mxu0 0.0
        %465 = vmatpush1.msra.mxu0 0.0
        %466 = vmatprep.subr.mxu0 0.0
        %467 = vmatpush1.msra.mxu0 0.0
        %468 = vmatprep.subr.mxu0 0.0
        %469 = vmatpush1.msra.mxu0 0.0
        %470 = vmatprep.subr.mxu0 0.0
        %471 = vmatpush1.msra.mxu0 0.0
        %472 = vmatprep.subr.mxu0 0.0
        %473 = vmatpush1.msra.mxu0 0.0
        %474 = vmatprep.subr.mxu0 0.0
        %475 = vmatpush1.msra.mxu0 0.0
        %476 = vmatprep.subr.mxu0 0.0
        %477 = vmatpush1.msra.mxu0 0.0
        %478 = vmatprep.subr.mxu0 0.0
        %479 = vmatpush1.msra.mxu0 0.0
        %480 = vmatprep.subr.mxu0 0.0
        %481 = vmatpush1.msra.mxu0 0.0
        %482 = vmatprep.subr.mxu0 0.0
        %483 = vmatpush1.msra.mxu0 0.0
        %484 = vmatprep.subr.mxu0 0.0
        %485 = vmatpush1.msra.mxu0 0.0
        %486 = vmatprep.mubr.f32.mxu0 0.0
        %487 = vmatmul.mubr.f32.gmra.mrb[0].mxu0 %v420
        %v488 = vpop.f32.mrb[0].mxu0
        %v489 = vadd.f32 %v416, %v488
        %v490 = vpop.f32.mrb[0].mxu0
        %491 = vdwg.mxu0
        %v492 = vld [vmem:[#allocation7] sm:$0xff]
        %v493 = vld [vmem:[#allocation7 + $0x8] sm:$0xff]
        %v494 = vld [vmem:[#allocation7 + $0x10] sm:$0xff]
        %v495 = vld [vmem:[#allocation7 + $0x18] sm:$0xff]
        %v496 = vld [vmem:[%s4] sm:$0x1]
        %v498 = vlaneseq
        %v499 = vshrl.u32 %v498, 7
        %v500 = vsub.s32 0, %v499
        %v501 = vrot.slane %v496, %v500
        %503 = vmatprep.subr.mxu0 0.0
        %504 = vmatpush1.msra.mxu0 %v492
        %505 = vmatprep.subr.mxu0 0.0
        %506 = vmatpush1.msra.mxu0 %v493
        %507 = vmatprep.subr.mxu0 0.0
        %508 = vmatpush1.msra.mxu0 %v494
        %509 = vmatprep.subr.mxu0 0.0
        %510 = vmatpush1.msra.mxu0 %v495
        %511 = vmatprep.subr.mxu0 0.0
        %512 = vmatpush1.msra.mxu0 0.0
        %513 = vmatprep.subr.mxu0 0.0
        %514 = vmatpush1.msra.mxu0 0.0
        %515 = vmatprep.subr.mxu0 0.0
        %516 = vmatpush1.msra.mxu0 0.0
        %517 = vmatprep.subr.mxu0 0.0
        %518 = vmatpush1.msra.mxu0 0.0
        %519 = vmatprep.subr.mxu0 0.0
        %520 = vmatpush1.msra.mxu0 0.0
        %521 = vmatprep.subr.mxu0 0.0
        %522 = vmatpush1.msra.mxu0 0.0
        %523 = vmatprep.subr.mxu0 0.0
        %524 = vmatpush1.msra.mxu0 0.0
        %525 = vmatprep.subr.mxu0 0.0
        %526 = vmatpush1.msra.mxu0 0.0
        %527 = vmatprep.subr.mxu0 0.0
        %528 = vmatpush1.msra.mxu0 0.0
        %529 = vmatprep.subr.mxu0 0.0
        %530 = vmatpush1.msra.mxu0 0.0
        %531 = vmatprep.subr.mxu0 0.0
        %532 = vmatpush1.msra.mxu0 0.0
        %533 = vmatprep.subr.mxu0 0.0
        %534 = vmatpush1.msra.mxu0 0.0
        %535 = vmatprep.subr.mxu0 0.0
        %536 = vmatpush1.msra.mxu0 0.0
        %537 = vmatprep.subr.mxu0 0.0
        %538 = vmatpush1.msra.mxu0 0.0
        %539 = vmatprep.subr.mxu0 0.0
        %540 = vmatpush1.msra.mxu0 0.0
        %541 = vmatprep.subr.mxu0 0.0
        %542 = vmatpush1.msra.mxu0 0.0
        %543 = vmatprep.subr.mxu0 0.0
        %544 = vmatpush1.msra.mxu0 0.0
        %545 = vmatprep.subr.mxu0 0.0
        %546 = vmatpush1.msra.mxu0 0.0
        %547 = vmatprep.subr.mxu0 0.0
        %548 = vmatpush1.msra.mxu0 0.0
        %549 = vmatprep.subr.mxu0 0.0
        %550 = vmatpush1.msra.mxu0 0.0
        %551 = vmatprep.subr.mxu0 0.0
        %552 = vmatpush1.msra.mxu0 0.0
        %553 = vmatprep.subr.mxu0 0.0
        %554 = vmatpush1.msra.mxu0 0.0
        %555 = vmatprep.subr.mxu0 0.0
        %556 = vmatpush1.msra.mxu0 0.0
        %557 = vmatprep.subr.mxu0 0.0
        %558 = vmatpush1.msra.mxu0 0.0
        %559 = vmatprep.subr.mxu0 0.0
        %560 = vmatpush1.msra.mxu0 0.0
        %561 = vmatprep.subr.mxu0 0.0
        %562 = vmatpush1.msra.mxu0 0.0
        %563 = vmatprep.subr.mxu0 0.0
        %564 = vmatpush1.msra.mxu0 0.0
        %565 = vmatprep.subr.mxu0 0.0
        %566 = vmatpush1.msra.mxu0 0.0
        %567 = vmatprep.mubr.f32.mxu0 0.0
        %568 = vmatmul.mubr.f32.gmra.mrb[0].mxu0 %v420
        %v569 = vpop.f32.mrb[0].mxu0
        %v570 = vadd.f32 %v501, %v569
        %v571 = vpop.f32.mrb[0].mxu0
        %572 = vdwg.mxu0
        %v573 = vld [vmem:[#allocation8] sm:$0xff]
        %v574 = vld [vmem:[#allocation8 + $0x8] sm:$0xff]
        %v575 = vld [vmem:[#allocation8 + $0x10] sm:$0xff]
        %v576 = vld [vmem:[#allocation8 + $0x18] sm:$0xff]
        %v577 = vld [vmem:[%s6] sm:$0x1]
        %v579 = vlaneseq
        %v580 = vshrl.u32 %v579, 7
        %v581 = vsub.s32 0, %v580
        %v582 = vrot.slane %v577, %v581
        %584 = vmatprep.subr.mxu0 0.0
        %585 = vmatpush1.msra.mxu0 %v573
        %586 = vmatprep.subr.mxu0 0.0
        %587 = vmatpush1.msra.mxu0 %v574
        %588 = vmatprep.subr.mxu0 0.0
        %589 = vmatpush1.msra.mxu0 %v575
        %590 = vmatprep.subr.mxu0 0.0
        %591 = vmatpush1.msra.mxu0 %v576
        %592 = vmatprep.subr.mxu0 0.0
        %593 = vmatpush1.msra.mxu0 0.0
        %594 = vmatprep.subr.mxu0 0.0
        %595 = vmatpush1.msra.mxu0 0.0
        %596 = vmatprep.subr.mxu0 0.0
        %597 = vmatpush1.msra.mxu0 0.0
        %598 = vmatprep.subr.mxu0 0.0
        %599 = vmatpush1.msra.mxu0 0.0
        %600 = vmatprep.subr.mxu0 0.0
        %601 = vmatpush1.msra.mxu0 0.0
        %602 = vmatprep.subr.mxu0 0.0
        %603 = vmatpush1.msra.mxu0 0.0
        %604 = vmatprep.subr.mxu0 0.0
        %605 = vmatpush1.msra.mxu0 0.0
        %606 = vmatprep.subr.mxu0 0.0
        %607 = vmatpush1.msra.mxu0 0.0
        %608 = vmatprep.subr.mxu0 0.0
        %609 = vmatpush1.msra.mxu0 0.0
        %610 = vmatprep.subr.mxu0 0.0
        %611 = vmatpush1.msra.mxu0 0.0
        %612 = vmatprep.subr.mxu0 0.0
        %613 = vmatpush1.msra.mxu0 0.0
        %614 = vmatprep.subr.mxu0 0.0
        %615 = vmatpush1.msra.mxu0 0.0
        %616 = vmatprep.subr.mxu0 0.0
        %617 = vmatpush1.msra.mxu0 0.0
        %618 = vmatprep.subr.mxu0 0.0
        %619 = vmatpush1.msra.mxu0 0.0
        %620 = vmatprep.subr.mxu0 0.0
        %621 = vmatpush1.msra.mxu0 0.0
        %622 = vmatprep.subr.mxu0 0.0
        %623 = vmatpush1.msra.mxu0 0.0
        %624 = vmatprep.subr.mxu0 0.0
        %625 = vmatpush1.msra.mxu0 0.0
        %626 = vmatprep.subr.mxu0 0.0
        %627 = vmatpush1.msra.mxu0 0.0
        %628 = vmatprep.subr.mxu0 0.0
        %629 = vmatpush1.msra.mxu0 0.0
        %630 = vmatprep.subr.mxu0 0.0
        %631 = vmatpush1.msra.mxu0 0.0
        %632 = vmatprep.subr.mxu0 0.0
        %633 = vmatpush1.msra.mxu0 0.0
        %634 = vmatprep.subr.mxu0 0.0
        %635 = vmatpush1.msra.mxu0 0.0
        %636 = vmatprep.subr.mxu0 0.0
        %637 = vmatpush1.msra.mxu0 0.0
        %638 = vmatprep.subr.mxu0 0.0
        %639 = vmatpush1.msra.mxu0 0.0
        %640 = vmatprep.subr.mxu0 0.0
        %641 = vmatpush1.msra.mxu0 0.0
        %642 = vmatprep.subr.mxu0 0.0
        %643 = vmatpush1.msra.mxu0 0.0
        %644 = vmatprep.subr.mxu0 0.0
        %645 = vmatpush1.msra.mxu0 0.0
        %646 = vmatprep.subr.mxu0 0.0
        %647 = vmatpush1.msra.mxu0 0.0
        %648 = vmatprep.mubr.f32.mxu0 0.0
        %649 = vmatmul.mubr.f32.gmra.mrb[0].mxu0 %v420
        %v650 = vpop.f32.mrb[0].mxu0
        %v651 = vadd.f32 %v582, %v650
        %v652 = vpop.f32.mrb[0].mxu0
        %653 = vdwg.mxu0
        %v654 = vld [vmem:[#allocation10] sm:$0xff]
        %v655 = vld [vmem:[#allocation10 + $0x8] sm:$0xff]
        %v656 = vld [vmem:[#allocation10 + $0x10] sm:$0xff]
        %v657 = vld [vmem:[#allocation10 + $0x18] sm:$0xff]
        %vm658 = vcmask 64512
        %v660 = vsel %vm658, %v489, 0
        %v663 = vsel %vm658, %v570, 0
        %665 = vmatprep.subr.mxu0 0.0
        %666 = vmatpush1.xpose.msra.mxu0 %v663
        %667 = vmatprep.subr.mxu0 0.0
        %668 = vmatpush1.xpose.msra.mxu0 0.0
        %669 = vmatprep.subr.mxu0 0.0
        %670 = vmatpush1.xpose.msra.mxu0 0.0
        %671 = vmatprep.subr.mxu0 0.0
        %672 = vmatpush1.xpose.msra.mxu0 0.0
        %673 = vmatprep.subr.mxu0 0.0
        %674 = vmatpush1.xpose.msra.mxu0 0.0
        %675 = vmatprep.subr.mxu0 0.0
        %676 = vmatpush1.xpose.msra.mxu0 0.0
        %677 = vmatprep.subr.mxu0 0.0
        %678 = vmatpush1.xpose.msra.mxu0 0.0
        %679 = vmatprep.subr.mxu0 0.0
        %680 = vmatpush1.xpose.msra.mxu0 0.0
        %681 = vmatprep.subr.mxu0 0.0
        %682 = vmatpush1.xpose.msra.mxu0 0.0
        %683 = vmatprep.subr.mxu0 0.0
        %684 = vmatpush1.xpose.msra.mxu0 0.0
        %685 = vmatprep.subr.mxu0 0.0
        %686 = vmatpush1.xpose.msra.mxu0 0.0
        %687 = vmatprep.subr.mxu0 0.0
        %688 = vmatpush1.xpose.msra.mxu0 0.0
        %689 = vmatprep.subr.mxu0 0.0
        %690 = vmatpush1.xpose.msra.mxu0 0.0
        %691 = vmatprep.subr.mxu0 0.0
        %692 = vmatpush1.xpose.msra.mxu0 0.0
        %693 = vmatprep.subr.mxu0 0.0
        %694 = vmatpush1.xpose.msra.mxu0 0.0
        %695 = vmatprep.subr.mxu0 0.0
        %696 = vmatpush1.xpose.msra.mxu0 0.0
        %697 = vmatprep.subr.mxu0 0.0
        %698 = vmatpush1.xpose.msra.mxu0 0.0
        %699 = vmatprep.subr.mxu0 0.0
        %700 = vmatpush1.xpose.msra.mxu0 0.0
        %701 = vmatprep.subr.mxu0 0.0
        %702 = vmatpush1.xpose.msra.mxu0 0.0
        %703 = vmatprep.subr.mxu0 0.0
        %704 = vmatpush1.xpose.msra.mxu0 0.0
        %705 = vmatprep.subr.mxu0 0.0
        %706 = vmatpush1.xpose.msra.mxu0 0.0
        %707 = vmatprep.subr.mxu0 0.0
        %708 = vmatpush1.xpose.msra.mxu0 0.0
        %709 = vmatprep.subr.mxu0 0.0
        %710 = vmatpush1.xpose.msra.mxu0 0.0
        %711 = vmatprep.subr.mxu0 0.0
        %712 = vmatpush1.xpose.msra.mxu0 0.0
        %713 = vmatprep.subr.mxu0 0.0
        %714 = vmatpush1.xpose.msra.mxu0 0.0
        %715 = vmatprep.subr.mxu0 0.0
        %716 = vmatpush1.xpose.msra.mxu0 0.0
        %717 = vmatprep.subr.mxu0 0.0
        %718 = vmatpush1.xpose.msra.mxu0 0.0
        %719 = vmatprep.subr.mxu0 0.0
        %720 = vmatpush1.xpose.msra.mxu0 0.0
        %721 = vmatprep.subr.mxu0 0.0
        %722 = vmatpush1.xpose.msra.mxu0 0.0
        %723 = vmatprep.subr.mxu0 0.0
        %724 = vmatpush1.xpose.msra.mxu0 0.0
        %725 = vmatprep.subr.mxu0 0.0
        %726 = vmatpush1.xpose.msra.mxu0 0.0
        %727 = vmatprep.subr.mxu0 0.0
        %728 = vmatpush1.xpose.msra.mxu0 0.0
        %729 = vmatprep.mubr.f32.mxu0 0.0
        %730 = vmatmul.mubr.f32.gmra.mrb[0].mxu0 %v660
        %v731 = vpop.f32.mrb[0].mxu0
        %v732 = vadd.f32 0.0, %v731
        %v733 = vpop.f32.mrb[0].mxu0
        %734 = vdwg.mxu0
        %v735 = vmul.f32 %v732, 0.35355338
        %v736 = vsel %vm658, %v735, -inf
        %737 = vmax.xlane.f32.xlu0 %v736
        %v738 = vpop.xlane.xlu0 %737
        %v739 = vsub.f32 %v735, %v738
        %v740 = vmul.f32 %v739, 1.442695
        %v741 = vpow.pop %v740
        %v742 = vsel %vm658, %v741, 0.0
        %743 = vadd.xlane.f32.xlu0 %v742
        %v744 = vpop.xlane.xlu0 %743
        %v745 = vrcp.pop %v744
        %v746 = vmul.f32 %v741, %v745
        %v748 = vsel %vm658, %v746, 0
        %750 = vmatprep.subr.mxu0 0.0
        %751 = vmatpush1.msra.mxu0 %v651
        %752 = vmatprep.subr.mxu0 0.0
        %753 = vmatpush1.msra.mxu0 0.0
        %754 = vmatprep.subr.mxu0 0.0
        %755 = vmatpush1.msra.mxu0 0.0
        %756 = vmatprep.subr.mxu0 0.0
        %757 = vmatpush1.msra.mxu0 0.0
        %758 = vmatprep.subr.mxu0 0.0
        %759 = vmatpush1.msra.mxu0 0.0
        %760 = vmatprep.subr.mxu0 0.0
        %761 = vmatpush1.msra.mxu0 0.0
        %762 = vmatprep.subr.mxu0 0.0
        %763 = vmatpush1.msra.mxu0 0.0
        %764 = vmatprep.subr.mxu0 0.0
        %765 = vmatpush1.msra.mxu0 0.0
        %766 = vmatprep.subr.mxu0 0.0
        %767 = vmatpush1.msra.mxu0 0.0
        %768 = vmatprep.subr.mxu0 0.0
        %769 = vmatpush1.msra.mxu0 0.0
        %770 = vmatprep.subr.mxu0 0.0
        %771 = vmatpush1.msra.mxu0 0.0
        %772 = vmatprep.subr.mxu0 0.0
        %773 = vmatpush1.msra.mxu0 0.0
        %774 = vmatprep.subr.mxu0 0.0
        %775 = vmatpush1.msra.mxu0 0.0
        %776 = vmatprep.subr.mxu0 0.0
        %777 = vmatpush1.msra.mxu0 0.0
        %778 = vmatprep.subr.mxu0 0.0
        %779 = vmatpush1.msra.mxu0 0.0
        %780 = vmatprep.subr.mxu0 0.0
        %781 = vmatpush1.msra.mxu0 0.0
        %782 = vmatprep.subr.mxu0 0.0
        %783 = vmatpush1.msra.mxu0 0.0
        %784 = vmatprep.subr.mxu0 0.0
        %785 = vmatpush1.msra.mxu0 0.0
        %786 = vmatprep.subr.mxu0 0.0
        %787 = vmatpush1.msra.mxu0 0.0
        %788 = vmatprep.subr.mxu0 0.0
        %789 = vmatpush1.msra.mxu0 0.0
        %790 = vmatprep.subr.mxu0 0.0
        %791 = vmatpush1.msra.mxu0 0.0
        %792 = vmatprep.subr.mxu0 0.0
        %793 = vmatpush1.msra.mxu0 0.0
        %794 = vmatprep.subr.mxu0 0.0
        %795 = vmatpush1.msra.mxu0 0.0
        %796 = vmatprep.subr.mxu0 0.0
        %797 = vmatpush1.msra.mxu0 0.0
        %798 = vmatprep.subr.mxu0 0.0
        %799 = vmatpush1.msra.mxu0 0.0
        %800 = vmatprep.subr.mxu0 0.0
        %801 = vmatpush1.msra.mxu0 0.0
        %802 = vmatprep.subr.mxu0 0.0
        %803 = vmatpush1.msra.mxu0 0.0
        %804 = vmatprep.subr.mxu0 0.0
        %805 = vmatpush1.msra.mxu0 0.0
        %806 = vmatprep.subr.mxu0 0.0
        %807 = vmatpush1.msra.mxu0 0.0
        %808 = vmatprep.subr.mxu0 0.0
        %809 = vmatpush1.msra.mxu0 0.0
        %810 = vmatprep.subr.mxu0 0.0
        %811 = vmatpush1.msra.mxu0 0.0
        %812 = vmatprep.subr.mxu0 0.0
        %813 = vmatpush1.msra.mxu0 0.0
        %814 = vmatprep.mubr.f32.mxu0 0.0
        %815 = vmatmul.mubr.f32.gmra.mrb[0].mxu0 %v748
        %v816 = vpop.f32.mrb[0].mxu0
        %v817 = vadd.f32 0.0, %v816
        %v818 = vpop.f32.mrb[0].mxu0
        %819 = vdwg.mxu0
        %820 = vrot.lane.b32.xlu0 %v489, 120
        %v821 = vpop.permute.xlu0 %820
        %822 = vrot.lane.b32.xlu0 %v570, 120
        %v823 = vpop.permute.xlu0 %822
        %v824 = vsel %vm658, %v821, 0
        %v826 = vsel %vm658, %v823, 0
        %828 = vmatprep.subr.mxu0 0.0
        %829 = vmatpush1.xpose.msra.mxu0 %v826
        %830 = vmatprep.subr.mxu0 0.0
        %831 = vmatpush1.xpose.msra.mxu0 0.0
        %832 = vmatprep.subr.mxu0 0.0
        %833 = vmatpush1.xpose.msra.mxu0 0.0
        %834 = vmatprep.subr.mxu0 0.0
        %835 = vmatpush1.xpose.msra.mxu0 0.0
        %836 = vmatprep.subr.mxu0 0.0
        %837 = vmatpush1.xpose.msra.mxu0 0.0
        %838 = vmatprep.subr.mxu0 0.0
        %839 = vmatpush1.xpose.msra.mxu0 0.0
        %840 = vmatprep.subr.mxu0 0.0
        %841 = vmatpush1.xpose.msra.mxu0 0.0
        %842 = vmatprep.subr.mxu0 0.0
        %843 = vmatpush1.xpose.msra.mxu0 0.0
        %844 = vmatprep.subr.mxu0 0.0
        %845 = vmatpush1.xpose.msra.mxu0 0.0
        %846 = vmatprep.subr.mxu0 0.0
        %847 = vmatpush1.xpose.msra.mxu0 0.0
        %848 = vmatprep.subr.mxu0 0.0
        %849 = vmatpush1.xpose.msra.mxu0 0.0
        %850 = vmatprep.subr.mxu0 0.0
        %851 = vmatpush1.xpose.msra.mxu0 0.0
        %852 = vmatprep.subr.mxu0 0.0
        %853 = vmatpush1.xpose.msra.mxu0 0.0
        %854 = vmatprep.subr.mxu0 0.0
        %855 = vmatpush1.xpose.msra.mxu0 0.0
        %856 = vmatprep.subr.mxu0 0.0
        %857 = vmatpush1.xpose.msra.mxu0 0.0
        %858 = vmatprep.subr.mxu0 0.0
        %859 = vmatpush1.xpose.msra.mxu0 0.0
        %860 = vmatprep.subr.mxu0 0.0
        %861 = vmatpush1.xpose.msra.mxu0 0.0
        %862 = vmatprep.subr.mxu0 0.0
        %863 = vmatpush1.xpose.msra.mxu0 0.0
        %864 = vmatprep.subr.mxu0 0.0
        %865 = vmatpush1.xpose.msra.mxu0 0.0
        %866 = vmatprep.subr.mxu0 0.0
        %867 = vmatpush1.xpose.msra.mxu0 0.0
        %868 = vmatprep.subr.mxu0 0.0
        %869 = vmatpush1.xpose.msra.mxu0 0.0
        %870 = vmatprep.subr.mxu0 0.0
        %871 = vmatpush1.xpose.msra.mxu0 0.0
        %872 = vmatprep.subr.mxu0 0.0
        %873 = vmatpush1.xpose.msra.mxu0 0.0
        %874 = vmatprep.subr.mxu0 0.0
        %875 = vmatpush1.xpose.msra.mxu0 0.0
        %876 = vmatprep.subr.mxu0 0.0
        %877 = vmatpush1.xpose.msra.mxu0 0.0
        %878 = vmatprep.subr.mxu0 0.0
        %879 = vmatpush1.xpose.msra.mxu0 0.0
        %880 = vmatprep.subr.mxu0 0.0
        %881 = vmatpush1.xpose.msra.mxu0 0.0
        %882 = vmatprep.subr.mxu0 0.0
        %883 = vmatpush1.xpose.msra.mxu0 0.0
        %884 = vmatprep.subr.mxu0 0.0
        %885 = vmatpush1.xpose.msra.mxu0 0.0
        %886 = vmatprep.subr.mxu0 0.0
        %887 = vmatpush1.xpose.msra.mxu0 0.0
        %888 = vmatprep.subr.mxu0 0.0
        %889 = vmatpush1.xpose.msra.mxu0 0.0
        %890 = vmatprep.subr.mxu0 0.0
        %891 = vmatpush1.xpose.msra.mxu0 0.0
        %892 = vmatprep.mubr.f32.mxu0 0.0
        %893 = vmatmul.mubr.f32.gmra.mrb[0].mxu0 %v824
        %v894 = vpop.f32.mrb[0].mxu0
        %v895 = vadd.f32 0.0, %v894
        %v896 = vpop.f32.mrb[0].mxu0
        %897 = vdwg.mxu0
        %v898 = vmul.f32 %v895, 0.35355338
        %v899 = vsel %vm658, %v898, -inf
        %900 = vmax.xlane.f32.xlu0 %v899
        %v901 = vpop.xlane.xlu0 %900
        %v902 = vsub.f32 %v898, %v901
        %v903 = vmul.f32 %v902, 1.442695
        %v904 = vpow.pop %v903
        %v905 = vsel %vm658, %v904, 0.0
        %906 = vadd.xlane.f32.xlu0 %v905
        %v907 = vpop.xlane.xlu0 %906
        %v908 = vrcp.pop %v907
        %v909 = vmul.f32 %v904, %v908
        %911 = vrot.lane.b32.xlu0 %v651, 120
        %v912 = vpop.permute.xlu0 %911
        %v915 = vsel %vm658, %v909, 0
        %917 = vmatprep.subr.mxu0 0.0
        %918 = vmatpush1.msra.mxu0 %v912
        %919 = vmatprep.subr.mxu0 0.0
        %920 = vmatpush1.msra.mxu0 0.0
        %921 = vmatprep.subr.mxu0 0.0
        %922 = vmatpush1.msra.mxu0 0.0
        %923 = vmatprep.subr.mxu0 0.0
        %924 = vmatpush1.msra.mxu0 0.0
        %925 = vmatprep.subr.mxu0 0.0
        %926 = vmatpush1.msra.mxu0 0.0
        %927 = vmatprep.subr.mxu0 0.0
        %928 = vmatpush1.msra.mxu0 0.0
        %929 = vmatprep.subr.mxu0 0.0
        %930 = vmatpush1.msra.mxu0 0.0
        %931 = vmatprep.subr.mxu0 0.0
        %932 = vmatpush1.msra.mxu0 0.0
        %933 = vmatprep.subr.mxu0 0.0
        %934 = vmatpush1.msra.mxu0 0.0
        %935 = vmatprep.subr.mxu0 0.0
        %936 = vmatpush1.msra.mxu0 0.0
        %937 = vmatprep.subr.mxu0 0.0
        %938 = vmatpush1.msra.mxu0 0.0
        %939 = vmatprep.subr.mxu0 0.0
        %940 = vmatpush1.msra.mxu0 0.0
        %941 = vmatprep.subr.mxu0 0.0
        %942 = vmatpush1.msra.mxu0 0.0
        %943 = vmatprep.subr.mxu0 0.0
        %944 = vmatpush1.msra.mxu0 0.0
        %945 = vmatprep.subr.mxu0 0.0
        %946 = vmatpush1.msra.mxu0 0.0
        %947 = vmatprep.subr.mxu0 0.0
        %948 = vmatpush1.msra.mxu0 0.0
        %949 = vmatprep.subr.mxu0 0.0
        %950 = vmatpush1.msra.mxu0 0.0
        %951 = vmatprep.subr.mxu0 0.0
        %952 = vmatpush1.msra.mxu0 0.0
        %953 = vmatprep.subr.mxu0 0.0
        %954 = vmatpush1.msra.mxu0 0.0
        %955 = vmatprep.subr.mxu0 0.0
        %956 = vmatpush1.msra.mxu0 0.0
        %957 = vmatprep.subr.mxu0 0.0
        %958 = vmatpush1.msra.mxu0 0.0
        %959 = vmatprep.subr.mxu0 0.0
        %960 = vmatpush1.msra.mxu0 0.0
        %961 = vmatprep.subr.mxu0 0.0
        %962 = vmatpush1.msra.mxu0 0.0
        %963 = vmatprep.subr.mxu0 0.0
        %964 = vmatpush1.msra.mxu0 0.0
        %965 = vmatprep.subr.mxu0 0.0
        %966 = vmatpush1.msra.mxu0 0.0
        %967 = vmatprep.subr.mxu0 0.0
        %968 = vmatpush1.msra.mxu0 0.0
        %969 = vmatprep.subr.mxu0 0.0
        %970 = vmatpush1.msra.mxu0 0.0
        %971 = vmatprep.subr.mxu0 0.0
        %972 = vmatpush1.msra.mxu0 0.0
        %973 = vmatprep.subr.mxu0 0.0
        %974 = vmatpush1.msra.mxu0 0.0
        %975 = vmatprep.subr.mxu0 0.0
        %976 = vmatpush1.msra.mxu0 0.0
        %977 = vmatprep.subr.mxu0 0.0
        %978 = vmatpush1.msra.mxu0 0.0
        %979 = vmatprep.subr.mxu0 0.0
        %980 = vmatpush1.msra.mxu0 0.0
        %981 = vmatprep.mubr.f32.mxu0 0.0
        %982 = vmatmul.mubr.f32.gmra.mrb[0].mxu0 %v915
        %v983 = vpop.f32.mrb[0].mxu0
        %v984 = vadd.f32 0.0, %v983
        %v985 = vpop.f32.mrb[0].mxu0
        %986 = vdwg.mxu0
        %v988 = vsel %vm658, %v984, 0
        %990 = vmatprep.subr.mxu0 0.0
        %991 = vmatpush1.msra.mxu0 %v655
        %992 = vmatprep.subr.mxu0 0.0
        %993 = vmatpush1.msra.mxu0 0.0
        %994 = vmatprep.subr.mxu0 0.0
        %995 = vmatpush1.msra.mxu0 0.0
        %996 = vmatprep.subr.mxu0 0.0
        %997 = vmatpush1.msra.mxu0 0.0
        %998 = vmatprep.subr.mxu0 0.0
        %999 = vmatpush1.msra.mxu0 0.0
        %1000 = vmatprep.subr.mxu0 0.0
        %1001 = vmatpush1.msra.mxu0 0.0
        %1002 = vmatprep.subr.mxu0 0.0
        %1003 = vmatpush1.msra.mxu0 0.0
        %1004 = vmatprep.subr.mxu0 0.0
        %1005 = vmatpush1.msra.mxu0 0.0
        %1006 = vmatprep.subr.mxu0 0.0
        %1007 = vmatpush1.msra.mxu0 0.0
        %1008 = vmatprep.subr.mxu0 0.0
        %1009 = vmatpush1.msra.mxu0 0.0
        %1010 = vmatprep.subr.mxu0 0.0
        %1011 = vmatpush1.msra.mxu0 0.0
        %1012 = vmatprep.subr.mxu0 0.0
        %1013 = vmatpush1.msra.mxu0 0.0
        %1014 = vmatprep.subr.mxu0 0.0
        %1015 = vmatpush1.msra.mxu0 0.0
        %1016 = vmatprep.subr.mxu0 0.0
        %1017 = vmatpush1.msra.mxu0 0.0
        %1018 = vmatprep.subr.mxu0 0.0
        %1019 = vmatpush1.msra.mxu0 0.0
        %1020 = vmatprep.subr.mxu0 0.0
        %1021 = vmatpush1.msra.mxu0 0.0
        %1022 = vmatprep.subr.mxu0 0.0
        %1023 = vmatpush1.msra.mxu0 0.0
        %1024 = vmatprep.subr.mxu0 0.0
        %1025 = vmatpush1.msra.mxu0 0.0
        %1026 = vmatprep.subr.mxu0 0.0
        %1027 = vmatpush1.msra.mxu0 0.0
        %1028 = vmatprep.subr.mxu0 0.0
        %1029 = vmatpush1.msra.mxu0 0.0
        %1030 = vmatprep.subr.mxu0 0.0
        %1031 = vmatpush1.msra.mxu0 0.0
        %1032 = vmatprep.subr.mxu0 0.0
        %1033 = vmatpush1.msra.mxu0 0.0
        %1034 = vmatprep.subr.mxu0 0.0
        %1035 = vmatpush1.msra.mxu0 0.0
        %1036 = vmatprep.subr.mxu0 0.0
        %1037 = vmatpush1.msra.mxu0 0.0
        %1038 = vmatprep.subr.mxu0 0.0
        %1039 = vmatpush1.msra.mxu0 0.0
        %1040 = vmatprep.subr.mxu0 0.0
        %1041 = vmatpush1.msra.mxu0 0.0
        %1042 = vmatprep.subr.mxu0 0.0
        %1043 = vmatpush1.msra.mxu0 0.0
        %1044 = vmatprep.subr.mxu0 0.0
        %1045 = vmatpush1.msra.mxu0 0.0
        %1046 = vmatprep.subr.mxu0 0.0
        %1047 = vmatpush1.msra.mxu0 0.0
        %1048 = vmatprep.subr.mxu0 0.0
        %1049 = vmatpush1.msra.mxu0 0.0
        %1050 = vmatprep.subr.mxu0 0.0
        %1051 = vmatpush1.msra.mxu0 0.0
        %1052 = vmatprep.subr.mxu0 0.0
        %1053 = vmatpush1.msra.mxu0 0.0
        %1054 = vmatprep.mubr.f32.mxu0 0.0
        %1055 = vmatmul.mubr.f32.gmra.mrb[0].mxu0 %v988
        %v1056 = vpop.f32.mrb[0].mxu0
        %v1057 = vadd.f32 0.0, %v1056
        %v1058 = vpop.f32.mrb[0].mxu0
        %1059 = vdwg.mxu0
        %v1061 = vsel %vm658, %v817, 0
        %1063 = vmatprep.subr.mxu0 0.0
        %1064 = vmatpush1.msra.mxu0 %v654
        %1065 = vmatprep.subr.mxu0 0.0
        %1066 = vmatpush1.msra.mxu0 0.0
        %1067 = vmatprep.subr.mxu0 0.0
        %1068 = vmatpush1.msra.mxu0 0.0
        %1069 = vmatprep.subr.mxu0 0.0
        %1070 = vmatpush1.msra.mxu0 0.0
        %1071 = vmatprep.subr.mxu0 0.0
        %1072 = vmatpush1.msra.mxu0 0.0
        %1073 = vmatprep.subr.mxu0 0.0
        %1074 = vmatpush1.msra.mxu0 0.0
        %1075 = vmatprep.subr.mxu0 0.0
        %1076 = vmatpush1.msra.mxu0 0.0
        %1077 = vmatprep.subr.mxu0 0.0
        %1078 = vmatpush1.msra.mxu0 0.0
        %1079 = vmatprep.subr.mxu0 0.0
        %1080 = vmatpush1.msra.mxu0 0.0
        %1081 = vmatprep.subr.mxu0 0.0
        %1082 = vmatpush1.msra.mxu0 0.0
        %1083 = vmatprep.subr.mxu0 0.0
        %1084 = vmatpush1.msra.mxu0 0.0
        %1085 = vmatprep.subr.mxu0 0.0
        %1086 = vmatpush1.msra.mxu0 0.0
        %1087 = vmatprep.subr.mxu0 0.0
        %1088 = vmatpush1.msra.mxu0 0.0
        %1089 = vmatprep.subr.mxu0 0.0
        %1090 = vmatpush1.msra.mxu0 0.0
        %1091 = vmatprep.subr.mxu0 0.0
        %1092 = vmatpush1.msra.mxu0 0.0
        %1093 = vmatprep.subr.mxu0 0.0
        %1094 = vmatpush1.msra.mxu0 0.0
        %1095 = vmatprep.subr.mxu0 0.0
        %1096 = vmatpush1.msra.mxu0 0.0
        %1097 = vmatprep.subr.mxu0 0.0
        %1098 = vmatpush1.msra.mxu0 0.0
        %1099 = vmatprep.subr.mxu0 0.0
        %1100 = vmatpush1.msra.mxu0 0.0
        %1101 = vmatprep.subr.mxu0 0.0
        %1102 = vmatpush1.msra.mxu0 0.0
        %1103 = vmatprep.subr.mxu0 0.0
        %1104 = vmatpush1.msra.mxu0 0.0
        %1105 = vmatprep.subr.mxu0 0.0
        %1106 = vmatpush1.msra.mxu0 0.0
        %1107 = vmatprep.subr.mxu0 0.0
        %1108 = vmatpush1.msra.mxu0 0.0
        %1109 = vmatprep.subr.mxu0 0.0
        %1110 = vmatpush1.msra.mxu0 0.0
        %1111 = vmatprep.subr.mxu0 0.0
        %1112 = vmatpush1.msra.mxu0 0.0
        %1113 = vmatprep.subr.mxu0 0.0
        %1114 = vmatpush1.msra.mxu0 0.0
        %1115 = vmatprep.subr.mxu0 0.0
        %1116 = vmatpush1.msra.mxu0 0.0
        %1117 = vmatprep.subr.mxu0 0.0
        %1118 = vmatpush1.msra.mxu0 0.0
        %1119 = vmatprep.subr.mxu0 0.0
        %1120 = vmatpush1.msra.mxu0 0.0
        %1121 = vmatprep.subr.mxu0 0.0
        %1122 = vmatpush1.msra.mxu0 0.0
        %1123 = vmatprep.subr.mxu0 0.0
        %1124 = vmatpush1.msra.mxu0 0.0
        %1125 = vmatprep.subr.mxu0 0.0
        %1126 = vmatpush1.msra.mxu0 0.0
        %1127 = vmatprep.mubr.f32.mxu0 0.0
        %1128 = vmatmul.mubr.f32.gmra.mrb[0].mxu0 %v1061
        %v1129 = vpop.f32.mrb[0].mxu0
        %v1130 = vadd.f32 %v1057, %v1129
        %v1131 = vpop.f32.mrb[0].mxu0
        %1132 = vdwg.mxu0
        %1133 = vrot.lane.b32.xlu0 %v489, 112
        %v1134 = vpop.permute.xlu0 %1133
        %1135 = vrot.lane.b32.xlu0 %v570, 112
        %v1136 = vpop.permute.xlu0 %1135
        %v1137 = vsel %vm658, %v1134, 0
        %v1139 = vsel %vm658, %v1136, 0
        %1141 = vmatprep.subr.mxu0 0.0
        %1142 = vmatpush1.xpose.msra.mxu0 %v1139
        %1143 = vmatprep.subr.mxu0 0.0
        %1144 = vmatpush1.xpose.msra.mxu0 0.0
        %1145 = vmatprep.subr.mxu0 0.0
        %1146 = vmatpush1.xpose.msra.mxu0 0.0
        %1147 = vmatprep.subr.mxu0 0.0
        %1148 = vmatpush1.xpose.msra.mxu0 0.0
        %1149 = vmatprep.subr.mxu0 0.0
        %1150 = vmatpush1.xpose.msra.mxu0 0.0
        %1151 = vmatprep.subr.mxu0 0.0
        %1152 = vmatpush1.xpose.msra.mxu0 0.0
        %1153 = vmatprep.subr.mxu0 0.0
        %1154 = vmatpush1.xpose.msra.mxu0 0.0
        %1155 = vmatprep.subr.mxu0 0.0
        %1156 = vmatpush1.xpose.msra.mxu0 0.0
        %1157 = vmatprep.subr.mxu0 0.0
        %1158 = vmatpush1.xpose.msra.mxu0 0.0
        %1159 = vmatprep.subr.mxu0 0.0
        %1160 = vmatpush1.xpose.msra.mxu0 0.0
        %1161 = vmatprep.subr.mxu0 0.0
        %1162 = vmatpush1.xpose.msra.mxu0 0.0
        %1163 = vmatprep.subr.mxu0 0.0
        %1164 = vmatpush1.xpose.msra.mxu0 0.0
        %1165 = vmatprep.subr.mxu0 0.0
        %1166 = vmatpush1.xpose.msra.mxu0 0.0
        %1167 = vmatprep.subr.mxu0 0.0
        %1168 = vmatpush1.xpose.msra.mxu0 0.0
        %1169 = vmatprep.subr.mxu0 0.0
        %1170 = vmatpush1.xpose.msra.mxu0 0.0
        %1171 = vmatprep.subr.mxu0 0.0
        %1172 = vmatpush1.xpose.msra.mxu0 0.0
        %1173 = vmatprep.subr.mxu0 0.0
        %1174 = vmatpush1.xpose.msra.mxu0 0.0
        %1175 = vmatprep.subr.mxu0 0.0
        %1176 = vmatpush1.xpose.msra.mxu0 0.0
        %1177 = vmatprep.subr.mxu0 0.0
        %1178 = vmatpush1.xpose.msra.mxu0 0.0
        %1179 = vmatprep.subr.mxu0 0.0
        %1180 = vmatpush1.xpose.msra.mxu0 0.0
        %1181 = vmatprep.subr.mxu0 0.0
        %1182 = vmatpush1.xpose.msra.mxu0 0.0
        %1183 = vmatprep.subr.mxu0 0.0
        %1184 = vmatpush1.xpose.msra.mxu0 0.0
        %1185 = vmatprep.subr.mxu0 0.0
        %1186 = vmatpush1.xpose.msra.mxu0 0.0
        %1187 = vmatprep.subr.mxu0 0.0
        %1188 = vmatpush1.xpose.msra.mxu0 0.0
        %1189 = vmatprep.subr.mxu0 0.0
        %1190 = vmatpush1.xpose.msra.mxu0 0.0
        %1191 = vmatprep.subr.mxu0 0.0
        %1192 = vmatpush1.xpose.msra.mxu0 0.0
        %1193 = vmatprep.subr.mxu0 0.0
        %1194 = vmatpush1.xpose.msra.mxu0 0.0
        %1195 = vmatprep.subr.mxu0 0.0
        %1196 = vmatpush1.xpose.msra.mxu0 0.0
        %1197 = vmatprep.subr.mxu0 0.0
        %1198 = vmatpush1.xpose.msra.mxu0 0.0
        %1199 = vmatprep.subr.mxu0 0.0
        %1200 = vmatpush1.xpose.msra.mxu0 0.0
        %1201 = vmatprep.subr.mxu0 0.0
        %1202 = vmatpush1.xpose.msra.mxu0 0.0
        %1203 = vmatprep.subr.mxu0 0.0
        %1204 = vmatpush1.xpose.msra.mxu0 0.0
        %1205 = vmatprep.mubr.f32.mxu0 0.0
        %1206 = vmatmul.mubr.f32.gmra.mrb[0].mxu0 %v1137
        %v1207 = vpop.f32.mrb[0].mxu0
        %v1208 = vadd.f32 0.0, %v1207
        %v1209 = vpop.f32.mrb[0].mxu0
        %1210 = vdwg.mxu0
        %v1211 = vmul.f32 %v1208, 0.35355338
        %v1212 = vsel %vm658, %v1211, -inf
        %1213 = vmax.xlane.f32.xlu0 %v1212
        %v1214 = vpop.xlane.xlu0 %1213
        %v1215 = vsub.f32 %v1211, %v1214
        %v1216 = vmul.f32 %v1215, 1.442695
        %v1217 = vpow.pop %v1216
        %v1218 = vsel %vm658, %v1217, 0.0
        %1219 = vadd.xlane.f32.xlu0 %v1218
        %v1220 = vpop.xlane.xlu0 %1219
        %v1221 = vrcp.pop %v1220
        %v1222 = vmul.f32 %v1217, %v1221
        %1223 = vrot.lane.b32.xlu0 %v651, 112
        %v1224 = vpop.permute.xlu0 %1223
        %v1227 = vsel %vm658, %v1222, 0
        %1229 = vmatprep.subr.mxu0 0.0
        %1230 = vmatpush1.msra.mxu0 %v1224
        %1231 = vmatprep.subr.mxu0 0.0
        %1232 = vmatpush1.msra.mxu0 0.0
        %1233 = vmatprep.subr.mxu0 0.0
        %1234 = vmatpush1.msra.mxu0 0.0
        %1235 = vmatprep.subr.mxu0 0.0
        %1236 = vmatpush1.msra.mxu0 0.0
        %1237 = vmatprep.subr.mxu0 0.0
        %1238 = vmatpush1.msra.mxu0 0.0
        %1239 = vmatprep.subr.mxu0 0.0
        %1240 = vmatpush1.msra.mxu0 0.0
        %1241 = vmatprep.subr.mxu0 0.0
        %1242 = vmatpush1.msra.mxu0 0.0
        %1243 = vmatprep.subr.mxu0 0.0
        %1244 = vmatpush1.msra.mxu0 0.0
        %1245 = vmatprep.subr.mxu0 0.0
        %1246 = vmatpush1.msra.mxu0 0.0
        %1247 = vmatprep.subr.mxu0 0.0
        %1248 = vmatpush1.msra.mxu0 0.0
        %1249 = vmatprep.subr.mxu0 0.0
        %1250 = vmatpush1.msra.mxu0 0.0
        %1251 = vmatprep.subr.mxu0 0.0
        %1252 = vmatpush1.msra.mxu0 0.0
        %1253 = vmatprep.subr.mxu0 0.0
        %1254 = vmatpush1.msra.mxu0 0.0
        %1255 = vmatprep.subr.mxu0 0.0
        %1256 = vmatpush1.msra.mxu0 0.0
        %1257 = vmatprep.subr.mxu0 0.0
        %1258 = vmatpush1.msra.mxu0 0.0
        %1259 = vmatprep.subr.mxu0 0.0
        %1260 = vmatpush1.msra.mxu0 0.0
        %1261 = vmatprep.subr.mxu0 0.0
        %1262 = vmatpush1.msra.mxu0 0.0
        %1263 = vmatprep.subr.mxu0 0.0
        %1264 = vmatpush1.msra.mxu0 0.0
        %1265 = vmatprep.subr.mxu0 0.0
        %1266 = vmatpush1.msra.mxu0 0.0
        %1267 = vmatprep.subr.mxu0 0.0
        %1268 = vmatpush1.msra.mxu0 0.0
        %1269 = vmatprep.subr.mxu0 0.0
        %1270 = vmatpush1.msra.mxu0 0.0
        %1271 = vmatprep.subr.mxu0 0.0
        %1272 = vmatpush1.msra.mxu0 0.0
        %1273 = vmatprep.subr.mxu0 0.0
        %1274 = vmatpush1.msra.mxu0 0.0
        %1275 = vmatprep.subr.mxu0 0.0
        %1276 = vmatpush1.msra.mxu0 0.0
        %1277 = vmatprep.subr.mxu0 0.0
        %1278 = vmatpush1.msra.mxu0 0.0
        %1279 = vmatprep.subr.mxu0 0.0
        %1280 = vmatpush1.msra.mxu0 0.0
        %1281 = vmatprep.subr.mxu0 0.0
        %1282 = vmatpush1.msra.mxu0 0.0
        %1283 = vmatprep.subr.mxu0 0.0
        %1284 = vmatpush1.msra.mxu0 0.0
        %1285 = vmatprep.subr.mxu0 0.0
        %1286 = vmatpush1.msra.mxu0 0.0
        %1287 = vmatprep.subr.mxu0 0.0
        %1288 = vmatpush1.msra.mxu0 0.0
        %1289 = vmatprep.subr.mxu0 0.0
        %1290 = vmatpush1.msra.mxu0 0.0
        %1291 = vmatprep.subr.mxu0 0.0
        %1292 = vmatpush1.msra.mxu0 0.0
        %1293 = vmatprep.mubr.f32.mxu0 0.0
        %1294 = vmatmul.mubr.f32.gmra.mrb[0].mxu0 %v1227
        %v1295 = vpop.f32.mrb[0].mxu0
        %v1296 = vadd.f32 0.0, %v1295
        %v1297 = vpop.f32.mrb[0].mxu0
        %1298 = vdwg.mxu0
        %v1300 = vsel %vm658, %v1296, 0
        %1302 = vmatprep.subr.mxu0 0.0
        %1303 = vmatpush1.msra.mxu0 %v656
        %1304 = vmatprep.subr.mxu0 0.0
        %1305 = vmatpush1.msra.mxu0 0.0
        %1306 = vmatprep.subr.mxu0 0.0
        %1307 = vmatpush1.msra.mxu0 0.0
        %1308 = vmatprep.subr.mxu0 0.0
        %1309 = vmatpush1.msra.mxu0 0.0
        %1310 = vmatprep.subr.mxu0 0.0
        %1311 = vmatpush1.msra.mxu0 0.0
        %1312 = vmatprep.subr.mxu0 0.0
        %1313 = vmatpush1.msra.mxu0 0.0
        %1314 = vmatprep.subr.mxu0 0.0
        %1315 = vmatpush1.msra.mxu0 0.0
        %1316 = vmatprep.subr.mxu0 0.0
        %1317 = vmatpush1.msra.mxu0 0.0
        %1318 = vmatprep.subr.mxu0 0.0
        %1319 = vmatpush1.msra.mxu0 0.0
        %1320 = vmatprep.subr.mxu0 0.0
        %1321 = vmatpush1.msra.mxu0 0.0
        %1322 = vmatprep.subr.mxu0 0.0
        %1323 = vmatpush1.msra.mxu0 0.0
        %1324 = vmatprep.subr.mxu0 0.0
        %1325 = vmatpush1.msra.mxu0 0.0
        %1326 = vmatprep.subr.mxu0 0.0
        %1327 = vmatpush1.msra.mxu0 0.0
        %1328 = vmatprep.subr.mxu0 0.0
        %1329 = vmatpush1.msra.mxu0 0.0
        %1330 = vmatprep.subr.mxu0 0.0
        %1331 = vmatpush1.msra.mxu0 0.0
        %1332 = vmatprep.subr.mxu0 0.0
        %1333 = vmatpush1.msra.mxu0 0.0
        %1334 = vmatprep.subr.mxu0 0.0
        %1335 = vmatpush1.msra.mxu0 0.0
        %1336 = vmatprep.subr.mxu0 0.0
        %1337 = vmatpush1.msra.mxu0 0.0
        %1338 = vmatprep.subr.mxu0 0.0
        %1339 = vmatpush1.msra.mxu0 0.0
        %1340 = vmatprep.subr.mxu0 0.0
        %1341 = vmatpush1.msra.mxu0 0.0
        %1342 = vmatprep.subr.mxu0 0.0
        %1343 = vmatpush1.msra.mxu0 0.0
        %1344 = vmatprep.subr.mxu0 0.0
        %1345 = vmatpush1.msra.mxu0 0.0
        %1346 = vmatprep.subr.mxu0 0.0
        %1347 = vmatpush1.msra.mxu0 0.0
        %1348 = vmatprep.subr.mxu0 0.0
        %1349 = vmatpush1.msra.mxu0 0.0
        %1350 = vmatprep.subr.mxu0 0.0
        %1351 = vmatpush1.msra.mxu0 0.0
        %1352 = vmatprep.subr.mxu0 0.0
        %1353 = vmatpush1.msra.mxu0 0.0
        %1354 = vmatprep.subr.mxu0 0.0
        %1355 = vmatpush1.msra.mxu0 0.0
        %1356 = vmatprep.subr.mxu0 0.0
        %1357 = vmatpush1.msra.mxu0 0.0
        %1358 = vmatprep.subr.mxu0 0.0
        %1359 = vmatpush1.msra.mxu0 0.0
        %1360 = vmatprep.subr.mxu0 0.0
        %1361 = vmatpush1.msra.mxu0 0.0
        %1362 = vmatprep.subr.mxu0 0.0
        %1363 = vmatpush1.msra.mxu0 0.0
        %1364 = vmatprep.subr.mxu0 0.0
        %1365 = vmatpush1.msra.mxu0 0.0
        %1366 = vmatprep.mubr.f32.mxu0 0.0
        %1367 = vmatmul.mubr.f32.gmra.mrb[0].mxu0 %v1300
        %v1368 = vpop.f32.mrb[0].mxu0
        %v1369 = vadd.f32 0.0, %v1368
        %v1370 = vpop.f32.mrb[0].mxu0
        %1371 = vdwg.mxu0
        %v1372 = vadd.f32 %v1130, %v1369
        %1373 = vrot.lane.b32.xlu0 %v489, 104
        %v1374 = vpop.permute.xlu0 %1373
        %1375 = vrot.lane.b32.xlu0 %v570, 104
        %v1376 = vpop.permute.xlu0 %1375
        %v1377 = vsel %vm658, %v1374, 0
        %v1379 = vsel %vm658, %v1376, 0
        %1381 = vmatprep.subr.mxu0 0.0
        %1382 = vmatpush1.xpose.msra.mxu0 %v1379
        %1383 = vmatprep.subr.mxu0 0.0
        %1384 = vmatpush1.xpose.msra.mxu0 0.0
        %1385 = vmatprep.subr.mxu0 0.0
        %1386 = vmatpush1.xpose.msra.mxu0 0.0
        %1387 = vmatprep.subr.mxu0 0.0
        %1388 = vmatpush1.xpose.msra.mxu0 0.0
        %1389 = vmatprep.subr.mxu0 0.0
        %1390 = vmatpush1.xpose.msra.mxu0 0.0
        %1391 = vmatprep.subr.mxu0 0.0
        %1392 = vmatpush1.xpose.msra.mxu0 0.0
        %1393 = vmatprep.subr.mxu0 0.0
        %1394 = vmatpush1.xpose.msra.mxu0 0.0
        %1395 = vmatprep.subr.mxu0 0.0
        %1396 = vmatpush1.xpose.msra.mxu0 0.0
        %1397 = vmatprep.subr.mxu0 0.0
        %1398 = vmatpush1.xpose.msra.mxu0 0.0
        %1399 = vmatprep.subr.mxu0 0.0
        %1400 = vmatpush1.xpose.msra.mxu0 0.0
        %1401 = vmatprep.subr.mxu0 0.0
        %1402 = vmatpush1.xpose.msra.mxu0 0.0
        %1403 = vmatprep.subr.mxu0 0.0
        %1404 = vmatpush1.xpose.msra.mxu0 0.0
        %1405 = vmatprep.subr.mxu0 0.0
        %1406 = vmatpush1.xpose.msra.mxu0 0.0
        %1407 = vmatprep.subr.mxu0 0.0
        %1408 = vmatpush1.xpose.msra.mxu0 0.0
        %1409 = vmatprep.subr.mxu0 0.0
        %1410 = vmatpush1.xpose.msra.mxu0 0.0
        %1411 = vmatprep.subr.mxu0 0.0
        %1412 = vmatpush1.xpose.msra.mxu0 0.0
        %1413 = vmatprep.subr.mxu0 0.0
        %1414 = vmatpush1.xpose.msra.mxu0 0.0
        %1415 = vmatprep.subr.mxu0 0.0
        %1416 = vmatpush1.xpose.msra.mxu0 0.0
        %1417 = vmatprep.subr.mxu0 0.0
        %1418 = vmatpush1.xpose.msra.mxu0 0.0
        %1419 = vmatprep.subr.mxu0 0.0
        %1420 = vmatpush1.xpose.msra.mxu0 0.0
        %1421 = vmatprep.subr.mxu0 0.0
        %1422 = vmatpush1.xpose.msra.mxu0 0.0
        %1423 = vmatprep.subr.mxu0 0.0
        %1424 = vmatpush1.xpose.msra.mxu0 0.0
        %1425 = vmatprep.subr.mxu0 0.0
        %1426 = vmatpush1.xpose.msra.mxu0 0.0
        %1427 = vmatprep.subr.mxu0 0.0
        %1428 = vmatpush1.xpose.msra.mxu0 0.0
        %1429 = vmatprep.subr.mxu0 0.0
        %1430 = vmatpush1.xpose.msra.mxu0 0.0
        %1431 = vmatprep.subr.mxu0 0.0
        %1432 = vmatpush1.xpose.msra.mxu0 0.0
        %1433 = vmatprep.subr.mxu0 0.0
        %1434 = vmatpush1.xpose.msra.mxu0 0.0
        %1435 = vmatprep.subr.mxu0 0.0
        %1436 = vmatpush1.xpose.msra.mxu0 0.0
        %1437 = vmatprep.subr.mxu0 0.0
        %1438 = vmatpush1.xpose.msra.mxu0 0.0
        %1439 = vmatprep.subr.mxu0 0.0
        %1440 = vmatpush1.xpose.msra.mxu0 0.0
        %1441 = vmatprep.subr.mxu0 0.0
        %1442 = vmatpush1.xpose.msra.mxu0 0.0
        %1443 = vmatprep.subr.mxu0 0.0
        %1444 = vmatpush1.xpose.msra.mxu0 0.0
        %1445 = vmatprep.mubr.f32.mxu0 0.0
        %1446 = vmatmul.mubr.f32.gmra.mrb[0].mxu0 %v1377
        %v1447 = vpop.f32.mrb[0].mxu0
        %v1448 = vadd.f32 0.0, %v1447
        %v1449 = vpop.f32.mrb[0].mxu0
        %1450 = vdwg.mxu0
        %v1451 = vmul.f32 %v1448, 0.35355338
        %v1452 = vsel %vm658, %v1451, -inf
        %1453 = vmax.xlane.f32.xlu0 %v1452
        %v1454 = vpop.xlane.xlu0 %1453
        %v1455 = vsub.f32 %v1451, %v1454
        %v1456 = vmul.f32 %v1455, 1.442695
        %v1457 = vpow.pop %v1456
        %v1458 = vsel %vm658, %v1457, 0.0
        %1459 = vadd.xlane.f32.xlu0 %v1458
        %v1460 = vpop.xlane.xlu0 %1459
        %v1461 = vrcp.pop %v1460
        %v1462 = vmul.f32 %v1457, %v1461
        %1463 = vrot.lane.b32.xlu0 %v651, 104
        %v1464 = vpop.permute.xlu0 %1463
        %v1467 = vsel %vm658, %v1462, 0
        %1469 = vmatprep.subr.mxu0 0.0
        %1470 = vmatpush1.msra.mxu0 %v1464
        %1471 = vmatprep.subr.mxu0 0.0
        %1472 = vmatpush1.msra.mxu0 0.0
        %1473 = vmatprep.subr.mxu0 0.0
        %1474 = vmatpush1.msra.mxu0 0.0
        %1475 = vmatprep.subr.mxu0 0.0
        %1476 = vmatpush1.msra.mxu0 0.0
        %1477 = vmatprep.subr.mxu0 0.0
        %1478 = vmatpush1.msra.mxu0 0.0
        %1479 = vmatprep.subr.mxu0 0.0
        %1480 = vmatpush1.msra.mxu0 0.0
        %1481 = vmatprep.subr.mxu0 0.0
        %1482 = vmatpush1.msra.mxu0 0.0
        %1483 = vmatprep.subr.mxu0 0.0
        %1484 = vmatpush1.msra.mxu0 0.0
        %1485 = vmatprep.subr.mxu0 0.0
        %1486 = vmatpush1.msra.mxu0 0.0
        %1487 = vmatprep.subr.mxu0 0.0
        %1488 = vmatpush1.msra.mxu0 0.0
        %1489 = vmatprep.subr.mxu0 0.0
        %1490 = vmatpush1.msra.mxu0 0.0
        %1491 = vmatprep.subr.mxu0 0.0
        %1492 = vmatpush1.msra.mxu0 0.0
        %1493 = vmatprep.subr.mxu0 0.0
        %1494 = vmatpush1.msra.mxu0 0.0
        %1495 = vmatprep.subr.mxu0 0.0
        %1496 = vmatpush1.msra.mxu0 0.0
        %1497 = vmatprep.subr.mxu0 0.0
        %1498 = vmatpush1.msra.mxu0 0.0
        %1499 = vmatprep.subr.mxu0 0.0
        %1500 = vmatpush1.msra.mxu0 0.0
        %1501 = vmatprep.subr.mxu0 0.0
        %1502 = vmatpush1.msra.mxu0 0.0
        %1503 = vmatprep.subr.mxu0 0.0
        %1504 = vmatpush1.msra.mxu0 0.0
        %1505 = vmatprep.subr.mxu0 0.0
        %1506 = vmatpush1.msra.mxu0 0.0
        %1507 = vmatprep.subr.mxu0 0.0
        %1508 = vmatpush1.msra.mxu0 0.0
        %1509 = vmatprep.subr.mxu0 0.0
        %1510 = vmatpush1.msra.mxu0 0.0
        %1511 = vmatprep.subr.mxu0 0.0
        %1512 = vmatpush1.msra.mxu0 0.0
        %1513 = vmatprep.subr.mxu0 0.0
        %1514 = vmatpush1.msra.mxu0 0.0
        %1515 = vmatprep.subr.mxu0 0.0
        %1516 = vmatpush1.msra.mxu0 0.0
        %1517 = vmatprep.subr.mxu0 0.0
        %1518 = vmatpush1.msra.mxu0 0.0
        %1519 = vmatprep.subr.mxu0 0.0
        %1520 = vmatpush1.msra.mxu0 0.0
        %1521 = vmatprep.subr.mxu0 0.0
        %1522 = vmatpush1.msra.mxu0 0.0
        %1523 = vmatprep.subr.mxu0 0.0
        %1524 = vmatpush1.msra.mxu0 0.0
        %1525 = vmatprep.subr.mxu0 0.0
        %1526 = vmatpush1.msra.mxu0 0.0
        %1527 = vmatprep.subr.mxu0 0.0
        %1528 = vmatpush1.msra.mxu0 0.0
        %1529 = vmatprep.subr.mxu0 0.0
        %1530 = vmatpush1.msra.mxu0 0.0
        %1531 = vmatprep.subr.mxu0 0.0
        %1532 = vmatpush1.msra.mxu0 0.0
        %1533 = vmatprep.mubr.f32.mxu0 0.0
        %1534 = vmatmul.mubr.f32.gmra.mrb[0].mxu0 %v1467
        %v1535 = vpop.f32.mrb[0].mxu0
        %v1536 = vadd.f32 0.0, %v1535
        %v1537 = vpop.f32.mrb[0].mxu0
        %1538 = vdwg.mxu0
        %v1540 = vsel %vm658, %v1536, 0
        %1542 = vmatprep.subr.mxu0 0.0
        %1543 = vmatpush1.msra.mxu0 %v657
        %1544 = vmatprep.subr.mxu0 0.0
        %1545 = vmatpush1.msra.mxu0 0.0
        %1546 = vmatprep.subr.mxu0 0.0
        %1547 = vmatpush1.msra.mxu0 0.0
        %1548 = vmatprep.subr.mxu0 0.0
        %1549 = vmatpush1.msra.mxu0 0.0
        %1550 = vmatprep.subr.mxu0 0.0
        %1551 = vmatpush1.msra.mxu0 0.0
        %1552 = vmatprep.subr.mxu0 0.0
        %1553 = vmatpush1.msra.mxu0 0.0
        %1554 = vmatprep.subr.mxu0 0.0
        %1555 = vmatpush1.msra.mxu0 0.0
        %1556 = vmatprep.subr.mxu0 0.0
        %1557 = vmatpush1.msra.mxu0 0.0
        %1558 = vmatprep.subr.mxu0 0.0
        %1559 = vmatpush1.msra.mxu0 0.0
        %1560 = vmatprep.subr.mxu0 0.0
        %1561 = vmatpush1.msra.mxu0 0.0
        %1562 = vmatprep.subr.mxu0 0.0
        %1563 = vmatpush1.msra.mxu0 0.0
        %1564 = vmatprep.subr.mxu0 0.0
        %1565 = vmatpush1.msra.mxu0 0.0
        %1566 = vmatprep.subr.mxu0 0.0
        %1567 = vmatpush1.msra.mxu0 0.0
        %1568 = vmatprep.subr.mxu0 0.0
        %1569 = vmatpush1.msra.mxu0 0.0
        %1570 = vmatprep.subr.mxu0 0.0
        %1571 = vmatpush1.msra.mxu0 0.0
        %1572 = vmatprep.subr.mxu0 0.0
        %1573 = vmatpush1.msra.mxu0 0.0
        %1574 = vmatprep.subr.mxu0 0.0
        %1575 = vmatpush1.msra.mxu0 0.0
        %1576 = vmatprep.subr.mxu0 0.0
        %1577 = vmatpush1.msra.mxu0 0.0
        %1578 = vmatprep.subr.mxu0 0.0
        %1579 = vmatpush1.msra.mxu0 0.0
        %1580 = vmatprep.subr.mxu0 0.0
        %1581 = vmatpush1.msra.mxu0 0.0
        %1582 = vmatprep.subr.mxu0 0.0
        %1583 = vmatpush1.msra.mxu0 0.0
        %1584 = vmatprep.subr.mxu0 0.0
        %1585 = vmatpush1.msra.mxu0 0.0
        %1586 = vmatprep.subr.mxu0 0.0
        %1587 = vmatpush1.msra.mxu0 0.0
        %1588 = vmatprep.subr.mxu0 0.0
        %1589 = vmatpush1.msra.mxu0 0.0
        %1590 = vmatprep.subr.mxu0 0.0
        %1591 = vmatpush1.msra.mxu0 0.0
        %1592 = vmatprep.subr.mxu0 0.0
        %1593 = vmatpush1.msra.mxu0 0.0
        %1594 = vmatprep.subr.mxu0 0.0
        %1595 = vmatpush1.msra.mxu0 0.0
        %1596 = vmatprep.subr.mxu0 0.0
        %1597 = vmatpush1.msra.mxu0 0.0
        %1598 = vmatprep.subr.mxu0 0.0
        %1599 = vmatpush1.msra.mxu0 0.0
        %1600 = vmatprep.subr.mxu0 0.0
        %1601 = vmatpush1.msra.mxu0 0.0
        %1602 = vmatprep.subr.mxu0 0.0
        %1603 = vmatpush1.msra.mxu0 0.0
        %1604 = vmatprep.subr.mxu0 0.0
        %1605 = vmatpush1.msra.mxu0 0.0
        %1606 = vmatprep.mubr.f32.mxu0 0.0
        %1607 = vmatmul.mubr.f32.gmra.mrb[0].mxu0 %v1540
        %v1608 = vpop.f32.mrb[0].mxu0
        %v1609 = vadd.f32 0.0, %v1608
        %v1610 = vpop.f32.mrb[0].mxu0
        %1611 = vdwg.mxu0
        %v1612 = vadd.f32 %v1372, %v1609
        %v1613 = vld [vmem:[%s8] sm:$0x1]
        %v1615 = vlaneseq
        %v1616 = vshrl.u32 %v1615, 7
        %v1617 = vsub.s32 0, %v1616
        %v1618 = vrot.slane %v1613, %v1617
        %v1620 = vadd.f32 %v1612, %v1618
        %1621 = vst.msk [vmem:[%s405] sm:$0xff] %vm418, %v1620
        %s1622 = sand.u32 %s230, 1
        %s1623 = scalar_lea.sflag [#allocation4], %s1622
        %s1624 = sand.u32 %s230, 1
        %s1625 = smul.addr %s1624, 8
        %s1626 = scalar_lea.vmem [#allocation11], %s1625
        // Predicated region
        $region77: #{self_attention_forward.1} parent=55 // pred_check
          %p1627 = pneg %p240
        $region78: #{self_attention_forward.1} parent=55 // pred_check_branch
          %1629 = sbr.rel (%p1627) target = $region80
        $region79: #{self_attention_forward.1} parent=55 // pred_region
          %s1631 = ssub.s32 128, 128
          %1632 = vsyncadd %s1623, %s1631
          %s1633 = smul.addr %s28, 128
          %s1634 = scalar_lea.hbm %s9, %s1633
          %s1636 = sshll.u32 %s1626, 4
          %s1637 = int_to_ptr.vmem [resolvable:$true] %s1636
          %1639 = dma.vmem_to_hbm [thread:$0]  %s1637, 128, %s1634, %s1623
        $region80: #{self_attention_forward.1} parent=55 // pred_fallthru
          _
      $region56: #{self_attention_forward.1} parent=5 // pred_fallthru
        _
      %p1640 = scmp.le.s32.totalorder 2, %s23
      // Predicated region
      $region81: #{self_attention_forward.1} parent=5 // pred_check
        %p1641 = pneg %p1640
      $region82: #{self_attention_forward.1} parent=5 // pred_check_branch
        %1643 = sbr.rel (%p1641) target = $region84
      $region83: #{self_attention_forward.1} parent=5 // pred_region
        %s1644 = ssub.s32 %s23, 2
        // Predicated region
        $region85: #{self_attention_forward.1} parent=83 // pred_check
          %p1645 = pneg %p246
        $region86: #{self_attention_forward.1} parent=83 // pred_check_branch
          %1647 = sbr.rel (%p1645) target = $region88
        $region87: #{self_attention_forward.1} parent=83 // pred_region
          %s1648 = sand.u32 %s231, 1
          %s1649 = scalar_lea.sflag [#allocation4], %s1648
          %s1650 = sand.u32 %s231, 1
          %s1651 = smul.addr %s1650, 8
          %s1652 = scalar_lea.vmem [#allocation11], %s1651
          %1653 = dma.done %s1649, 128
        $region88: #{self_attention_forward.1} parent=83 // pred_fallthru
          _
      $region84: #{self_attention_forward.1} parent=5 // pred_fallthru
        _
    $region6: #{self_attention_forward.1} parent=1 // loop_footer
      %s27 = sadd.s32 1, %s23
    $region7: #{self_attention_forward.1} parent=1 // loop_footer_branch
      %22 = sbr.rel target = $region3
    $region8: #{self_attention_forward.1} parent=1 // loop_exit
      _
    %1654 = vsyncpa [#allocation3], 1
    %s1655 = scalar_lea.sflag [#allocation3], 1
    %1656 = vsyncpa %s1655, 1
    %1657 = vsyncpa [#allocation6], 1
    %1658 = vsyncpa [#allocation9], 1
    %1659 = vsyncpa [#allocation4], 1
    %s1660 = scalar_lea.sflag [#allocation4], 1
    %1661 = vsyncpa %s1660, 1

</llo_original>
